<compile_context>
chip_gen: v7x
topology: tpu7x:2x2x1
jax: 0.10.0
libtpu: 0.0.40
codegen_flags: <defaults>
</compile_context>

<pallas_src>
import functools
import math

import numpy as np
import jax
import jax.numpy as jnp
from jax.experimental import pallas as pl
from jax.experimental.pallas import tpu as pltpu


SEQ_TILE = 256            # row tile for projection rows and attention q/kv tiles
PROJ_K_TILE = 512         # reduction tile of the fused QKV projection
OUT_TM, OUT_TN, OUT_TK = 512, 512, 1024   # output-projection linear tiles
_VMEM_LIMIT = 48 * 1024 * 1024            # explicit scoped-VMEM budget (v7x-safe)
_MASK_VALUE = -1e30


def _round_up(x, m):
    return (x + m - 1) // m * m


def _fit_tile(tile, dim, granule=128):
    """Clamp a tile size to the (granule-rounded) dimension size."""
    return min(tile, _round_up(dim, granule))


# ----------------------------------------------------------------------------
# Fused QKV projection:  y = x @ Wqkv + b, emitted head-major.
#   x: (B, Sp, Ep) bf16;  w: (Ep, Nf) bf16;  b: (1, Nf) f32
#   outputs: q (B, H, Sp, hd), k/v (B, Hkv, Sp, hd)  all bf16
# Grid = (B, Sp/ts, Ep/tk), reduction axis last.
# ----------------------------------------------------------------------------
def _qkv_proj_kernel(x_ref, w_ref, b_ref, q_ref, k_ref, v_ref, acc_ref):
    kk = pl.program_id(2)

    @pl.when(kk == 0)
    def _():
        acc_ref[...] = jnp.zeros_like(acc_ref)

    acc_ref[...] += jnp.dot(x_ref[0], w_ref[...],
                            preferred_element_type=jnp.float32)

    @pl.when(kk == pl.num_programs(2) - 1)
    def _():
        y = acc_ref[...] + b_ref[...]          # (ts, Nf) f32, bias broadcasts
        _, H, _, hd = q_ref.shape
        Hkv = k_ref.shape[1]
        E = H * hd
        kvd = Hkv * hd
        # Per-head column slices written straight into head-major outputs; the
        # strided writes ride the idle XLU/store slots of this MXU-bound kernel.
        for h in range(H):
            q_ref[0, h, :, :] = y[:, h * hd:(h + 1) * hd].astype(q_ref.dtype)
        for j in range(Hkv):
            k_ref[0, j, :, :] = y[:, E + j * hd:
                                  E + (j + 1) * hd].astype(k_ref.dtype)
            v_ref[0, j, :, :] = y[:, E + kvd + j * hd:
                                  E + kvd + (j + 1) * hd].astype(v_ref.dtype)


def pallas_qkv_proj(xb, w, b, *, num_heads, num_kv_heads, head_dim, seq_tile):
    B, Sp, Ep = xb.shape
    Nf = w.shape[1]
    ts = seq_tile
    tk = _fit_tile(PROJ_K_TILE, Ep)            # divides Ep by construction

    q_shape = jax.ShapeDtypeStruct((B, num_heads, Sp, head_dim), jnp.bfloat16)
    kv_shape = jax.ShapeDtypeStruct((B, num_kv_heads, Sp, head_dim), jnp.bfloat16)

    return pl.pallas_call(
        _qkv_proj_kernel,
        out_shape=(q_shape, kv_shape, kv_shape),
        grid_spec=pltpu.PrefetchScalarGridSpec(
            num_scalar_prefetch=0,
            grid=(B, Sp // ts, Ep // tk),
            in_specs=[
                pl.BlockSpec((1, ts, tk), lambda b, s, k: (b, s, k)),
                pl.BlockSpec((tk, Nf), lambda b, s, k: (k, 0)),
                pl.BlockSpec((1, Nf), lambda b, s, k: (0, 0)),
            ],
            out_specs=[
                pl.BlockSpec((1, num_heads, ts, head_dim),
                             lambda b, s, k: (b, 0, s, 0)),
                pl.BlockSpec((1, num_kv_heads, ts, head_dim),
                             lambda b, s, k: (b, 0, s, 0)),
                pl.BlockSpec((1, num_kv_heads, ts, head_dim),
                             lambda b, s, k: (b, 0, s, 0)),
            ],
            scratch_shapes=[pltpu.VMEM((ts, Nf), jnp.float32)],
        ),
        compiler_params=pltpu.CompilerParams(
            dimension_semantics=("parallel", "parallel", "arbitrary"),
            vmem_limit_bytes=_VMEM_LIMIT),
    )(xb, w, b)


# ----------------------------------------------------------------------------
# Flash-style causal GQA attention on a lower-triangular grid.
#   q: (B, H, Sp, hd), k/v: (B, Hkv, Sp, hd)  (bf16, q already scaled)
#   out: (B, Sp, H*hd) bf16  (lane-dense, directly consumable by the O-proj)
# Grid = (B, T) with T = nq*(nq+1)/2; scalar-prefetched (qi, ki) tables pick
# the blocks, so no dead (ki > qi) iterations exist.
# ----------------------------------------------------------------------------
def _flash_gqa_kernel(qidx_ref, kidx_ref, q_ref, k_ref, v_ref, o_ref,
                      m_sc, l_sc, acc_sc):
    t = pl.program_id(1)
    qi = qidx_ref[t]
    ki = kidx_ref[t]
    _, H, ts, hd = q_ref.shape
    Hkv = k_ref.shape[1]
    g = H // Hkv

    @pl.when(ki == 0)
    def _():
        m_sc[...] = jnp.full_like(m_sc, _MASK_VALUE)
        l_sc[...] = jnp.zeros_like(l_sc)
        acc_sc[...] = jnp.zeros_like(acc_sc)

    # Causal mask in global indices (shared by every head of the tile).
    local_row = jax.lax.broadcasted_iota(
        jnp.int32, (g, ts, ts), 1).reshape(g * ts, ts)
    col = jax.lax.broadcasted_iota(jnp.int32, (g * ts, ts), 1)
    keep = (ki * ts + col) <= (qi * ts + local_row)

    for j in range(Hkv):
        r0, r1 = j * g * ts, (j + 1) * g * ts
        # Fold the g query heads of this KV group into the MXU M dimension.
        q = q_ref[0, j * g:(j + 1) * g].reshape(g * ts, hd)
        k = k_ref[0, j]                                        # (ts, hd)
        s = jax.lax.dot_general(q, k, (((1,), (1,)), ((), ())),
                                preferred_element_type=jnp.float32)
        s = jnp.where(keep, s, _MASK_VALUE)

        m_prev = m_sc[r0:r1]
        m_new = jnp.maximum(m_prev, jnp.max(s, axis=-1, keepdims=True))
        alpha = jnp.exp(m_prev - m_new)
        p = jnp.exp(s - m_new)
        l_sc[r0:r1] = alpha * l_sc[r0:r1] + jnp.sum(p, axis=-1, keepdims=True)
        acc_sc[r0:r1] = alpha * acc_sc[r0:r1] + jax.lax.dot_general(
            p.astype(v_ref.dtype), v_ref[0, j],
            (((1,), (0,)), ((), ())), preferred_element_type=jnp.float32)
        m_sc[r0:r1] = m_new

    # With tq == tk, the diagonal tile is always the last kv step of a q row.
    @pl.when(ki == qi)
    def _():
        out = acc_sc[...] * pl.reciprocal(l_sc[...], approx=True)
        for h in range(H):
            o_ref[0, :, h * hd:(h + 1) * hd] = \
                out[h * ts:(h + 1) * ts].astype(o_ref.dtype)


def pallas_gqa_attention(q, k, v, *, seq_tile):
    B, H, Sp, hd = q.shape
    Hkv = k.shape[1]
    ts = seq_tile
    nq = Sp // ts

    # Lower-triangular (qi, ki) schedule, ki ascending within each qi.
    qidx = np.concatenate([np.full(i + 1, i, np.int32) for i in range(nq)])
    kidx = np.concatenate([np.arange(i + 1, dtype=np.int32) for i in range(nq)])
    T = int(qidx.shape[0])

    return pl.pallas_call(
        _flash_gqa_kernel,
        out_shape=jax.ShapeDtypeStruct((B, Sp, H * hd), q.dtype),
        grid_spec=pltpu.PrefetchScalarGridSpec(
            num_scalar_prefetch=2,
            grid=(B, T),
            in_specs=[
                pl.BlockSpec((1, H, ts, hd),
                             lambda b, t, qt, kt: (b, 0, qt[t], 0)),
                pl.BlockSpec((1, Hkv, ts, hd),
                             lambda b, t, qt, kt: (b, 0, kt[t], 0)),
                pl.BlockSpec((1, Hkv, ts, hd),
                             lambda b, t, qt, kt: (b, 0, kt[t], 0)),
            ],
            out_specs=pl.BlockSpec((1, ts, H * hd),
                                   lambda b, t, qt, kt: (b, qt[t], 0)),
            scratch_shapes=[
                pltpu.VMEM((H * ts, 1), jnp.float32),    # running max m
                pltpu.VMEM((H * ts, 1), jnp.float32),    # running denom l
                pltpu.VMEM((H * ts, hd), jnp.float32),   # output accumulator
            ],
        ),
        compiler_params=pltpu.CompilerParams(
            dimension_semantics=("parallel", "arbitrary"),
            vmem_limit_bytes=_VMEM_LIMIT),
    )(jnp.asarray(qidx), jnp.asarray(kidx), q, k, v)


# ----------------------------------------------------------------------------
# Generic tiled linear (used for the output projection):  y = x @ W + b
#   w: pre-padded (Kp, Np) bf16;  b: (1, Np) f32  (both prepared once).
# ----------------------------------------------------------------------------
def _linear_kernel(x_ref, w_ref, b_ref, o_ref, acc_ref):
    kk = pl.program_id(2)

    @pl.when(kk == 0)
    def _():
        acc_ref[...] = jnp.zeros_like(acc_ref)

    acc_ref[...] += jnp.dot(x_ref[...], w_ref[...],
                            preferred_element_type=jnp.float32)

    @pl.when(kk == pl.num_programs(2) - 1)
    def _():
        o_ref[...] = (acc_ref[...] + b_ref[...]).astype(o_ref.dtype)


def pallas_linear(x, w, b, *, out_dtype, n_valid=None,
                  tm=OUT_TM, tn=OUT_TN, tk=OUT_TK):
    M, K = x.shape
    Kp, Np = w.shape
    tm = min(tm, _round_up(M, 16))
    Mp = _round_up(M, tm)
    tn = min(tn, Np)
    tk = min(tk, Kp)

    xb = x.astype(jnp.bfloat16)
    if (Mp, Kp) != (M, K):
        xb = jnp.pad(xb, ((0, Mp - M), (0, Kp - K)))

    out = pl.pallas_call(
        _linear_kernel,
        out_shape=jax.ShapeDtypeStruct((Mp, Np), out_dtype),
        grid_spec=pltpu.PrefetchScalarGridSpec(
            num_scalar_prefetch=0,
            grid=(Mp // tm, Np // tn, Kp // tk),
            in_specs=[
                pl.BlockSpec((tm, tk), lambda i, j, k: (i, k)),
                pl.BlockSpec((tk, tn), lambda i, j, k: (k, j)),
                pl.BlockSpec((1, tn), lambda i, j, k: (0, j)),
            ],
            out_specs=pl.BlockSpec((tm, tn), lambda i, j, k: (i, j)),
            scratch_shapes=[pltpu.VMEM((tm, tn), jnp.float32)],
        ),
        compiler_params=pltpu.CompilerParams(
            dimension_semantics=("parallel", "parallel", "arbitrary"),
            vmem_limit_bytes=_VMEM_LIMIT),
    )(xb, w, b)

    n_valid = Np if n_valid is None else n_valid
    if (Mp, Np) != (M, n_valid):
        out = out[:M, :n_valid]
    return out


# ----------------------------------------------------------------------------
# Parameters: PyTorch-Linear-shaped init + one-time preparation
# ----------------------------------------------------------------------------
def init_params(key, embed_dim, num_heads, num_kv_heads):
    """PyTorch-Linear-shaped parameters (out_features, in_features), f32."""
    kv_group = num_heads // num_kv_heads
    kv_dim = embed_dim // kv_group
    keys = jax.random.split(key, 8)

    def lin(kw, kb, out_f, in_f):
        bound = 1.0 / math.sqrt(in_f)
        w = jax.random.uniform(kw, (out_f, in_f), jnp.float32, -bound, bound)
        b = jax.random.uniform(kb, (out_f,), jnp.float32, -bound, bound)
        return w, b

    q_w, q_b = lin(keys[0], keys[1], embed_dim, embed_dim)
    k_w, k_b = lin(keys[2], keys[3], kv_dim, embed_dim)
    v_w, v_b = lin(keys[4], keys[5], kv_dim, embed_dim)
    o_w, o_b = lin(keys[6], keys[7], embed_dim, embed_dim)
    return dict(q_w=q_w, q_b=q_b, k_w=k_w, k_b=k_b,
                v_w=v_w, v_b=v_b, o_w=o_w, o_b=o_b)


def prepare_params(params, *, embed_dim, num_heads, num_kv_heads):
    """One-time plumbing: transpose weights to (In, Out), fuse Q/K/V, fold the
    1/sqrt(head_dim) softmax scale into the Q projection, pad to tile granules
    and cast to bf16 (biases stay f32).  Nothing here runs per forward call."""
    E = embed_dim
    head_dim = E // num_heads
    scale = 1.0 / math.sqrt(head_dim)

    qkv_w = jnp.concatenate(
        [params["q_w"].T * scale, params["k_w"].T, params["v_w"].T], axis=1)
    qkv_b = jnp.concatenate(
        [params["q_b"] * scale, params["k_b"], params["v_b"]])

    tk = _fit_tile(PROJ_K_TILE, E)
    Ep = _round_up(E, tk)
    qkv_w = jnp.pad(qkv_w, ((0, Ep - E), (0, 0))).astype(jnp.bfloat16)
    qkv_b = qkv_b.astype(jnp.float32).reshape(1, -1)

    tko = _fit_tile(OUT_TK, E)
    Kp = _round_up(E, tko)
    tno = _fit_tile(OUT_TN, E)
    Np = _round_up(E, tno)
    o_w = jnp.pad(params["o_w"].T, ((0, Kp - E), (0, Np - E))).astype(jnp.bfloat16)
    o_b = jnp.pad(params["o_b"], (0, Np - E)).astype(jnp.float32).reshape(1, -1)

    return dict(qkv_w=qkv_w, qkv_b=qkv_b, o_w=o_w, o_b=o_b)


# ----------------------------------------------------------------------------
# Full forward
# ----------------------------------------------------------------------------
def gqa_forward(x, prepared, *, num_heads, num_kv_heads):
    B, S, E = x.shape
    head_dim = E // num_heads

    ts = min(SEQ_TILE, _round_up(S, 16))
    Sp = _round_up(S, ts)
    Ep = prepared["qkv_w"].shape[0]

    xb = x.astype(jnp.bfloat16)
    if (Sp, Ep) != (S, E):
        xb = jnp.pad(xb, ((0, 0), (0, Sp - S), (0, Ep - E)))

    # Fused QKV projection: x read from HBM once; outputs already head-major.
    q, k, v = pallas_qkv_proj(
        xb, prepared["qkv_w"], prepared["qkv_b"],
        num_heads=num_heads, num_kv_heads=num_kv_heads,
        head_dim=head_dim, seq_tile=ts)

    # Causal flash GQA; output is a lane-dense (B, Sp, E) slab.
    o = pallas_gqa_attention(q, k, v, seq_tile=ts)

    # O-projection consumes the slab directly (reshape below is metadata-only).
    out = pallas_linear(o.reshape(B * Sp, E), prepared["o_w"], prepared["o_b"],
                        out_dtype=jnp.float32, n_valid=E)
    out = out.reshape(B, Sp, E)
    if Sp != S:
        out = out[:, :S]
    return out


# ----------------------------------------------------------------------------
# Pure-JAX reference (f32) for validation
# ----------------------------------------------------------------------------
def reference_forward(x, params, *, num_heads, num_kv_heads):
    B, S, E = x.shape
    hd = E // num_heads
    g = num_heads // num_kv_heads
    q = x @ params["q_w"].T + params["q_b"]
    k = x @ params["k_w"].T + params["k_b"]
    v = x @ params["v_w"].T + params["v_b"]
    q = q.reshape(B, S, num_heads, hd).transpose(0, 2, 1, 3)
    k = k.reshape(B, S, num_kv_heads, hd).transpose(0, 2, 1, 3)
    v = v.reshape(B, S, num_kv_heads, hd).transpose(0, 2, 1, 3)
    k = jnp.repeat(k, g, axis=1)
    v = jnp.repeat(v, g, axis=1)
    s = jnp.einsum("bhqd,bhkd->bhqk", q, k) / math.sqrt(hd)
    mask = jnp.tril(jnp.ones((S, S), dtype=bool))
    s = jnp.where(mask, s, -jnp.inf)
    w = jax.nn.softmax(s, axis=-1)
    o = jnp.einsum("bhqk,bhkd->bhqd", w, v)
    o = o.transpose(0, 2, 1, 3).reshape(B, S, E)
    return o @ params["o_w"].T + params["o_b"]


if __name__ == "__main__":
    # Small shapes consistent with the module: B=2, S=8, E=32, H=4, Hkv=2.
    B, S, E = 2, 8, 32
    num_heads, num_kv_heads = 4, 2

    key = jax.random.PRNGKey(0)
    k_x, k_p = jax.random.split(key)
    x = jax.random.normal(k_x, (B, S, E), dtype=jnp.float32)
    params = init_params(k_p, E, num_heads, num_kv_heads)
    prepared = prepare_params(params, embed_dim=E, num_heads=num_heads,
                              num_kv_heads=num_kv_heads)

    fwd = jax.jit(functools.partial(
        gqa_forward, num_heads=num_heads, num_kv_heads=num_kv_heads))
    out = jax.block_until_ready(fwd(x, prepared))

    assert out.shape == (B, S, E)
    assert bool(jnp.all(jnp.isfinite(out)))
    ref = reference_forward(x, params, num_heads=num_heads,
                            num_kv_heads=num_kv_heads)
    max_err = float(jnp.max(jnp.abs(out - ref)))
    assert max_err < 1e-1, f"max abs error vs f32 reference: {max_err}"
    print("KERNEL_OK")
</pallas_src>

<mosaic_0001>
module attributes {stable_mosaic.version = 11 : i64} {
  func.func @_qkv_proj_kernel(%arg0: i32, %arg1: i32, %arg2: i32, %arg3: memref<1x16x128xbf16, #tpu.memory_space<vmem>>, %arg4: memref<128x64xbf16, #tpu.memory_space<vmem>>, %arg5: memref<1x64xf32, #tpu.memory_space<vmem>>, %arg6: memref<1x4x16x8xbf16, #tpu.memory_space<vmem>>, %arg7: memref<1x2x16x8xbf16, #tpu.memory_space<vmem>>, %arg8: memref<1x2x16x8xbf16, #tpu.memory_space<vmem>>, %arg9: memref<16x64xf32, #tpu.memory_space<vmem>>) attributes {dimension_semantics = [#tpu.dimension_semantics<parallel>, #tpu.dimension_semantics<parallel>, #tpu.dimension_semantics<arbitrary>], iteration_bounds = array<i64: 2, 1, 1>, scalar_prefetch = 0 : i64, scratch_operands = 1 : i64, tpu.core_type = #tpu.core_type<tc>, window_params = [{transform_indices = @transform_0, window_bounds = array<i64: 1, 16, 128>}, {transform_indices = @transform_1, window_bounds = array<i64: 128, 64>}, {pipeline_mode = #tpu.pipeline_mode<synchronous>, transform_indices = @transform_2, window_bounds = array<i64: 1, 64>}, {transform_indices = @transform_3, window_bounds = array<i64: 1, 4, 16, 8>}, {transform_indices = @transform_4, window_bounds = array<i64: 1, 2, 16, 8>}, {transform_indices = @transform_5, window_bounds = array<i64: 1, 2, 16, 8>}]} {
    %c0_i32 = arith.constant 0 : i32
    %0 = arith.cmpi eq, %arg2, %c0_i32 : i32
    %1 = arith.extui %0 : i1 to i32
    %c0_i32_0 = arith.constant 0 : i32
    %2 = arith.cmpi ne, %1, %c0_i32_0 : i32
    scf.if %2 {
      %cst_11 = arith.constant 0.000000e+00 : f32
      %13 = vector.broadcast %cst_11 : f32 to vector<16x64xf32>
      %c0_12 = arith.constant 0 : index
      %c0_13 = arith.constant 0 : index
      %14 = vector.load %arg9[%c0_12, %c0_13] : memref<16x64xf32, #tpu.memory_space<vmem>>, vector<16x64xf32>
      tpu.vector_store %arg9[%c0_12, %c0_13], %13 {strides = array<i32>} : memref<16x64xf32, #tpu.memory_space<vmem>>, vector<16x64xf32>,
    } else {
    }
    %c0 = arith.constant 0 : index
    %c0_1 = arith.constant 0 : index
    %3 = vector.load %arg9[%c0, %c0_1] : memref<16x64xf32, #tpu.memory_space<vmem>>, vector<16x64xf32>
    %c0_2 = arith.constant 0 : index
    %c0_3 = arith.constant 0 : index
    %c0_4 = arith.constant 0 : index
    %4 = vector.load %arg3[%c0_2, %c0_3, %c0_4] : memref<1x16x128xbf16, #tpu.memory_space<vmem>>, vector<1x16x128xbf16>
    %5 = vector.shape_cast %4 : vector<1x16x128xbf16> to vector<16x128xbf16>
    %c0_5 = arith.constant 0 : index
    %c0_6 = arith.constant 0 : index
    %6 = vector.load %arg4[%c0_5, %c0_6] : memref<128x64xbf16, #tpu.memory_space<vmem>>, vector<128x64xbf16>
    %cst = arith.constant dense<0.000000e+00> : vector<16x64xf32>
    %7 = tpu.matmul %5, %6, %cst {dimension_numbers = #tpu.dot_dimension_numbers<[1], [0], [0], [1], [0, 0, 1, 1], [], []>} : vector<16x128xbf16>, vector<128x64xbf16>, vector<16x64xf32> -> vector<16x64xf32>
    %8 = arith.addf %3, %7 : vector<16x64xf32>
    %c0_7 = arith.constant 0 : index
    %c0_8 = arith.constant 0 : index
    %9 = vector.load %arg9[%c0_7, %c0_8] : memref<16x64xf32, #tpu.memory_space<vmem>>, vector<16x64xf32>
    tpu.vector_store %arg9[%c0_7, %c0_8], %8 {strides = array<i32>} : memref<16x64xf32, #tpu.memory_space<vmem>>, vector<16x64xf32>,
    %c0_i32_9 = arith.constant 0 : i32
    %10 = arith.cmpi eq, %arg2, %c0_i32_9 : i32
    %11 = arith.extui %10 : i1 to i32
    %c0_i32_10 = arith.constant 0 : i32
    %12 = arith.cmpi ne, %11, %c0_i32_10 : i32
    scf.if %12 {
      %c0_11 = arith.constant 0 : index
      %c0_12 = arith.constant 0 : index
      %13 = vector.load %arg9[%c0_11, %c0_12] : memref<16x64xf32, #tpu.memory_space<vmem>>, vector<16x64xf32>
      %c0_13 = arith.constant 0 : index
      %c0_14 = arith.constant 0 : index
      %14 = vector.load %arg5[%c0_13, %c0_14] : memref<1x64xf32, #tpu.memory_space<vmem>>, vector<1x64xf32>
      %15 = vector.broadcast %14 : vector<1x64xf32> to vector<16x64xf32>
      %16 = arith.addf %13, %15 : vector<16x64xf32>
      %17 = vector.extract_strided_slice %16 {offsets = [0, 0], sizes = [16, 8], strides = [1, 1]} : vector<16x64xf32> to vector<16x8xf32>
      %18 = arith.truncf %17 : vector<16x8xf32> to vector<16x8xbf16>
      %c0_15 = arith.constant 0 : index
      %c0_16 = arith.constant 0 : index
      %c0_17 = arith.constant 0 : index
      %c0_18 = arith.constant 0 : index
      %19 = vector.load %arg6[%c0_15, %c0_16, %c0_17, %c0_18] : memref<1x4x16x8xbf16, #tpu.memory_space<vmem>>, vector<1x1x16x8xbf16>
      %20 = vector.shape_cast %19 : vector<1x1x16x8xbf16> to vector<16x8xbf16>
      %21 = vector.shape_cast %18 : vector<16x8xbf16> to vector<1x1x16x8xbf16>
      tpu.vector_store %arg6[%c0_15, %c0_16, %c0_17, %c0_18], %21 {strides = array<i32>} : memref<1x4x16x8xbf16, #tpu.memory_space<vmem>>, vector<1x1x16x8xbf16>,
      %22 = vector.extract_strided_slice %16 {offsets = [0, 8], sizes = [16, 8], strides = [1, 1]} : vector<16x64xf32> to vector<16x8xf32>
      %23 = arith.truncf %22 : vector<16x8xf32> to vector<16x8xbf16>
      %c0_19 = arith.constant 0 : index
      %c1 = arith.constant 1 : index
      %c0_20 = arith.constant 0 : index
      %c0_21 = arith.constant 0 : index
      %24 = vector.load %arg6[%c0_19, %c1, %c0_20, %c0_21] : memref<1x4x16x8xbf16, #tpu.memory_space<vmem>>, vector<1x1x16x8xbf16>
      %25 = vector.shape_cast %24 : vector<1x1x16x8xbf16> to vector<16x8xbf16>
      %26 = vector.shape_cast %23 : vector<16x8xbf16> to vector<1x1x16x8xbf16>
      tpu.vector_store %arg6[%c0_19, %c1, %c0_20, %c0_21], %26 {strides = array<i32>} : memref<1x4x16x8xbf16, #tpu.memory_space<vmem>>, vector<1x1x16x8xbf16>,
      %27 = vector.extract_strided_slice %16 {offsets = [0, 16], sizes = [16, 8], strides = [1, 1]} : vector<16x64xf32> to vector<16x8xf32>
      %28 = arith.truncf %27 : vector<16x8xf32> to vector<16x8xbf16>
      %c0_22 = arith.constant 0 : index
      %c2 = arith.constant 2 : index
      %c0_23 = arith.constant 0 : index
      %c0_24 = arith.constant 0 : index
      %29 = vector.load %arg6[%c0_22, %c2, %c0_23, %c0_24] : memref<1x4x16x8xbf16, #tpu.memory_space<vmem>>, vector<1x1x16x8xbf16>
      %30 = vector.shape_cast %29 : vector<1x1x16x8xbf16> to vector<16x8xbf16>
      %31 = vector.shape_cast %28 : vector<16x8xbf16> to vector<1x1x16x8xbf16>
      tpu.vector_store %arg6[%c0_22, %c2, %c0_23, %c0_24], %31 {strides = array<i32>} : memref<1x4x16x8xbf16, #tpu.memory_space<vmem>>, vector<1x1x16x8xbf16>,
      %32 = vector.extract_strided_slice %16 {offsets = [0, 24], sizes = [16, 8], strides = [1, 1]} : vector<16x64xf32> to vector<16x8xf32>
      %33 = arith.truncf %32 : vector<16x8xf32> to vector<16x8xbf16>
      %c0_25 = arith.constant 0 : index
      %c3 = arith.constant 3 : index
      %c0_26 = arith.constant 0 : index
      %c0_27 = arith.constant 0 : index
      %34 = vector.load %arg6[%c0_25, %c3, %c0_26, %c0_27] : memref<1x4x16x8xbf16, #tpu.memory_space<vmem>>, vector<1x1x16x8xbf16>
      %35 = vector.shape_cast %34 : vector<1x1x16x8xbf16> to vector<16x8xbf16>
      %36 = vector.shape_cast %33 : vector<16x8xbf16> to vector<1x1x16x8xbf16>
      tpu.vector_store %arg6[%c0_25, %c3, %c0_26, %c0_27], %36 {strides = array<i32>} : memref<1x4x16x8xbf16, #tpu.memory_space<vmem>>, vector<1x1x16x8xbf16>,
      %37 = vector.extract_strided_slice %16 {offsets = [0, 32], sizes = [16, 8], strides = [1, 1]} : vector<16x64xf32> to vector<16x8xf32>
      %38 = arith.truncf %37 : vector<16x8xf32> to vector<16x8xbf16>
      %c0_28 = arith.constant 0 : index
      %c0_29 = arith.constant 0 : index
      %c0_30 = arith.constant 0 : index
      %c0_31 = arith.constant 0 : index
      %39 = vector.load %arg7[%c0_28, %c0_29, %c0_30, %c0_31] : memref<1x2x16x8xbf16, #tpu.memory_space<vmem>>, vector<1x1x16x8xbf16>
      %40 = vector.shape_cast %39 : vector<1x1x16x8xbf16> to vector<16x8xbf16>
      %41 = vector.shape_cast %38 : vector<16x8xbf16> to vector<1x1x16x8xbf16>
      tpu.vector_store %arg7[%c0_28, %c0_29, %c0_30, %c0_31], %41 {strides = array<i32>} : memref<1x2x16x8xbf16, #tpu.memory_space<vmem>>, vector<1x1x16x8xbf16>,
      %42 = vector.extract_strided_slice %16 {offsets = [0, 48], sizes = [16, 8], strides = [1, 1]} : vector<16x64xf32> to vector<16x8xf32>
      %43 = arith.truncf %42 : vector<16x8xf32> to vector<16x8xbf16>
      %c0_32 = arith.constant 0 : index
      %c0_33 = arith.constant 0 : index
      %c0_34 = arith.constant 0 : index
      %c0_35 = arith.constant 0 : index
      %44 = vector.load %arg8[%c0_32, %c0_33, %c0_34, %c0_35] : memref<1x2x16x8xbf16, #tpu.memory_space<vmem>>, vector<1x1x16x8xbf16>
      %45 = vector.shape_cast %44 : vector<1x1x16x8xbf16> to vector<16x8xbf16>
      %46 = vector.shape_cast %43 : vector<16x8xbf16> to vector<1x1x16x8xbf16>
      tpu.vector_store %arg8[%c0_32, %c0_33, %c0_34, %c0_35], %46 {strides = array<i32>} : memref<1x2x16x8xbf16, #tpu.memory_space<vmem>>, vector<1x1x16x8xbf16>,
      %47 = vector.extract_strided_slice %16 {offsets = [0, 40], sizes = [16, 8], strides = [1, 1]} : vector<16x64xf32> to vector<16x8xf32>
      %48 = arith.truncf %47 : vector<16x8xf32> to vector<16x8xbf16>
      %c0_36 = arith.constant 0 : index
      %c1_37 = arith.constant 1 : index
      %c0_38 = arith.constant 0 : index
      %c0_39 = arith.constant 0 : index
      %49 = vector.load %arg7[%c0_36, %c1_37, %c0_38, %c0_39] : memref<1x2x16x8xbf16, #tpu.memory_space<vmem>>, vector<1x1x16x8xbf16>
      %50 = vector.shape_cast %49 : vector<1x1x16x8xbf16> to vector<16x8xbf16>
      %51 = vector.shape_cast %48 : vector<16x8xbf16> to vector<1x1x16x8xbf16>
      tpu.vector_store %arg7[%c0_36, %c1_37, %c0_38, %c0_39], %51 {strides = array<i32>} : memref<1x2x16x8xbf16, #tpu.memory_space<vmem>>, vector<1x1x16x8xbf16>,
      %52 = vector.extract_strided_slice %16 {offsets = [0, 56], sizes = [16, 8], strides = [1, 1]} : vector<16x64xf32> to vector<16x8xf32>
      %53 = arith.truncf %52 : vector<16x8xf32> to vector<16x8xbf16>
      %c0_40 = arith.constant 0 : index
      %c1_41 = arith.constant 1 : index
      %c0_42 = arith.constant 0 : index
      %c0_43 = arith.constant 0 : index
      %54 = vector.load %arg8[%c0_40, %c1_41, %c0_42, %c0_43] : memref<1x2x16x8xbf16, #tpu.memory_space<vmem>>, vector<1x1x16x8xbf16>
      %55 = vector.shape_cast %54 : vector<1x1x16x8xbf16> to vector<16x8xbf16>
      %56 = vector.shape_cast %53 : vector<16x8xbf16> to vector<1x1x16x8xbf16>
      tpu.vector_store %arg8[%c0_40, %c1_41, %c0_42, %c0_43], %56 {strides = array<i32>} : memref<1x2x16x8xbf16, #tpu.memory_space<vmem>>, vector<1x1x16x8xbf16>,
    } else {
    }
    return
  }
  func.func @transform_0(%arg0: i32, %arg1: i32, %arg2: i32) -> (i32, i32, i32) {
    %c0_i32 = arith.constant 0 : i32
    return %arg0, %arg1, %arg2 : i32, i32, i32
  }
  func.func @transform_1(%arg0: i32, %arg1: i32, %arg2: i32) -> (i32, i32) {
    %c0_i32 = arith.constant 0 : i32
    %c0_i32_0 = arith.constant 0 : i32
    return %arg2, %c0_i32 : i32, i32
  }
  func.func @transform_2(%arg0: i32, %arg1: i32, %arg2: i32) -> (i32, i32) {
    %c0_i32 = arith.constant 0 : i32
    %c0_i32_0 = arith.constant 0 : i32
    %c0_i32_1 = arith.constant 0 : i32
    return %c0_i32, %c0_i32_0 : i32, i32
  }
  func.func @transform_3(%arg0: i32, %arg1: i32, %arg2: i32) -> (i32, i32, i32, i32) {
    %c0_i32 = arith.constant 0 : i32
    %c0_i32_0 = arith.constant 0 : i32
    %c0_i32_1 = arith.constant 0 : i32
    return %arg0, %c0_i32, %arg1, %c0_i32_0 : i32, i32, i32, i32
  }
  func.func @transform_4(%arg0: i32, %arg1: i32, %arg2: i32) -> (i32, i32, i32, i32) {
    %c0_i32 = arith.constant 0 : i32
    %c0_i32_0 = arith.constant 0 : i32
    %c0_i32_1 = arith.constant 0 : i32
    return %arg0, %c0_i32, %arg1, %c0_i32_0 : i32, i32, i32, i32
  }
  func.func @transform_5(%arg0: i32, %arg1: i32, %arg2: i32) -> (i32, i32, i32, i32) {
    %c0_i32 = arith.constant 0 : i32
    %c0_i32_0 = arith.constant 0 : i32
    %c0_i32_1 = arith.constant 0 : i32
    return %arg0, %c0_i32, %arg1, %c0_i32_0 : i32, i32, i32, i32
  }
}

module attributes {stable_mosaic.version = 11 : i64} {
  func.func @_linear_kernel(%arg0: i32, %arg1: i32, %arg2: i32, %arg3: memref<32x128xbf16, #tpu.memory_space<vmem>>, %arg4: memref<128x128xbf16, #tpu.memory_space<vmem>>, %arg5: memref<1x128xf32, #tpu.memory_space<vmem>>, %arg6: memref<32x128xf32, #tpu.memory_space<vmem>>, %arg7: memref<32x128xf32, #tpu.memory_space<vmem>>) attributes {dimension_semantics = [#tpu.dimension_semantics<parallel>, #tpu.dimension_semantics<parallel>, #tpu.dimension_semantics<arbitrary>], iteration_bounds = array<i64: 1, 1, 1>, scalar_prefetch = 0 : i64, scratch_operands = 1 : i64, tpu.core_type = #tpu.core_type<tc>, window_params = [{transform_indices = @transform_0, window_bounds = array<i64: 32, 128>}, {transform_indices = @transform_1, window_bounds = array<i64: 128, 128>}, {transform_indices = @transform_2, window_bounds = array<i64: 1, 128>}, {transform_indices = @transform_3, window_bounds = array<i64: 32, 128>}]} {
    %c0_i32 = arith.constant 0 : i32
    %0 = arith.cmpi eq, %arg2, %c0_i32 : i32
    %1 = arith.extui %0 : i1 to i32
    %c0_i32_0 = arith.constant 0 : i32
    %2 = arith.cmpi ne, %1, %c0_i32_0 : i32
    scf.if %2 {
      %cst_10 = arith.constant 0.000000e+00 : f32
      %12 = vector.broadcast %cst_10 : f32 to vector<32x128xf32>
      %c0_11 = arith.constant 0 : index
      %c0_12 = arith.constant 0 : index
      %13 = vector.load %arg7[%c0_11, %c0_12] : memref<32x128xf32, #tpu.memory_space<vmem>>, vector<32x128xf32>
      tpu.vector_store %arg7[%c0_11, %c0_12], %12 {strides = array<i32>} : memref<32x128xf32, #tpu.memory_space<vmem>>, vector<32x128xf32>,
    } else {
    }
    %c0 = arith.constant 0 : index
    %c0_1 = arith.constant 0 : index
    %3 = vector.load %arg7[%c0, %c0_1] : memref<32x128xf32, #tpu.memory_space<vmem>>, vector<32x128xf32>
    %c0_2 = arith.constant 0 : index
    %c0_3 = arith.constant 0 : index
    %4 = vector.load %arg3[%c0_2, %c0_3] : memref<32x128xbf16, #tpu.memory_space<vmem>>, vector<32x128xbf16>
    %c0_4 = arith.constant 0 : index
    %c0_5 = arith.constant 0 : index
    %5 = vector.load %arg4[%c0_4, %c0_5] : memref<128x128xbf16, #tpu.memory_space<vmem>>, vector<128x128xbf16>
    %cst = arith.constant dense<0.000000e+00> : vector<32x128xf32>
    %6 = tpu.matmul %4, %5, %cst {dimension_numbers = #tpu.dot_dimension_numbers<[1], [0], [0], [1], [0, 0, 1, 1], [], []>} : vector<32x128xbf16>, vector<128x128xbf16>, vector<32x128xf32> -> vector<32x128xf32>
    %7 = arith.addf %3, %6 : vector<32x128xf32>
    %c0_6 = arith.constant 0 : index
    %c0_7 = arith.constant 0 : index
    %8 = vector.load %arg7[%c0_6, %c0_7] : memref<32x128xf32, #tpu.memory_space<vmem>>, vector<32x128xf32>
    tpu.vector_store %arg7[%c0_6, %c0_7], %7 {strides = array<i32>} : memref<32x128xf32, #tpu.memory_space<vmem>>, vector<32x128xf32>,
    %c0_i32_8 = arith.constant 0 : i32
    %9 = arith.cmpi eq, %arg2, %c0_i32_8 : i32
    %10 = arith.extui %9 : i1 to i32
    %c0_i32_9 = arith.constant 0 : i32
    %11 = arith.cmpi ne, %10, %c0_i32_9 : i32
    scf.if %11 {
      %c0_10 = arith.constant 0 : index
      %c0_11 = arith.constant 0 : index
      %12 = vector.load %arg7[%c0_10, %c0_11] : memref<32x128xf32, #tpu.memory_space<vmem>>, vector<32x128xf32>
      %c0_12 = arith.constant 0 : index
      %c0_13 = arith.constant 0 : index
      %13 = vector.load %arg5[%c0_12, %c0_13] : memref<1x128xf32, #tpu.memory_space<vmem>>, vector<1x128xf32>
      %14 = vector.broadcast %13 : vector<1x128xf32> to vector<32x128xf32>
      %15 = arith.addf %12, %14 : vector<32x128xf32>
      %c0_14 = arith.constant 0 : index
      %c0_15 = arith.constant 0 : index
      %16 = vector.load %arg6[%c0_14, %c0_15] : memref<32x128xf32, #tpu.memory_space<vmem>>, vector<32x128xf32>
      tpu.vector_store %arg6[%c0_14, %c0_15], %15 {strides = array<i32>} : memref<32x128xf32, #tpu.memory_space<vmem>>, vector<32x128xf32>,
    } else {
    }
    return
  }
  func.func @transform_0(%arg0: i32, %arg1: i32, %arg2: i32) -> (i32, i32) {
    %c0_i32 = arith.constant 0 : i32
    return %arg0, %arg2 : i32, i32
  }
  func.func @transform_1(%arg0: i32, %arg1: i32, %arg2: i32) -> (i32, i32) {
    %c0_i32 = arith.constant 0 : i32
    return %arg2, %arg1 : i32, i32
  }
  func.func @transform_2(%arg0: i32, %arg1: i32, %arg2: i32) -> (i32, i32) {
    %c0_i32 = arith.constant 0 : i32
    %c0_i32_0 = arith.constant 0 : i32
    return %c0_i32, %arg1 : i32, i32
  }
  func.func @transform_3(%arg0: i32, %arg1: i32, %arg2: i32) -> (i32, i32) {
    %c0_i32 = arith.constant 0 : i32
    return %arg0, %arg1 : i32, i32
  }
}

module attributes {stable_mosaic.version = 11 : i64} {
  func.func @_flash_gqa_kernel(%arg0: i32, %arg1: i32, %arg2: memref<1xi32, #tpu.memory_space<smem>>, %arg3: memref<1xi32, #tpu.memory_space<smem>>, %arg4: memref<1x4x16x8xbf16, #tpu.memory_space<vmem>>, %arg5: memref<1x2x16x8xbf16, #tpu.memory_space<vmem>>, %arg6: memref<1x2x16x8xbf16, #tpu.memory_space<vmem>>, %arg7: memref<1x16x32xbf16, #tpu.memory_space<vmem>>, %arg8: memref<64x1xf32, #tpu.memory_space<vmem>>, %arg9: memref<64x1xf32, #tpu.memory_space<vmem>>, %arg10: memref<64x8xf32, #tpu.memory_space<vmem>>) attributes {dimension_semantics = [#tpu.dimension_semantics<parallel>, #tpu.dimension_semantics<arbitrary>], iteration_bounds = array<i64: 2, 1>, scalar_prefetch = 2 : i64, scratch_operands = 3 : i64, tpu.core_type = #tpu.core_type<tc>, window_params = [{transform_indices = @transform_0, window_bounds = array<i64: 1, 4, 16, 8>}, {transform_indices = @transform_1, window_bounds = array<i64: 1, 2, 16, 8>}, {transform_indices = @transform_2, window_bounds = array<i64: 1, 2, 16, 8>}, {transform_indices = @transform_3, window_bounds = array<i64: 1, 16, 32>}]} {
    %0 = arith.index_cast %arg1 : i32 to index
    %1 = memref.load %arg2[%0] : memref<1xi32, #tpu.memory_space<smem>>
    %2 = arith.index_cast %arg1 : i32 to index
    %3 = memref.load %arg3[%2] : memref<1xi32, #tpu.memory_space<smem>>
    %c0_i32 = arith.constant 0 : i32
    %4 = arith.cmpi eq, %3, %c0_i32 : i32
    %5 = arith.extui %4 : i1 to i32
    %c0_i32_0 = arith.constant 0 : i32
    %6 = arith.cmpi ne, %5, %c0_i32_0 : i32
    scf.if %6 {
      %cst_56 = arith.constant -1.000000e+30 : f32
      %86 = vector.broadcast %cst_56 : f32 to vector<64x1xf32>
      %c0_57 = arith.constant 0 : index
      %c0_58 = arith.constant 0 : index
      %87 = vector.load %arg8[%c0_57, %c0_58] : memref<64x1xf32, #tpu.memory_space<vmem>>, vector<64x1xf32>
      tpu.vector_store %arg8[%c0_57, %c0_58], %86 {strides = array<i32>} : memref<64x1xf32, #tpu.memory_space<vmem>>, vector<64x1xf32>,
      %cst_59 = arith.constant 0.000000e+00 : f32
      %88 = vector.broadcast %cst_59 : f32 to vector<64x1xf32>
      %c0_60 = arith.constant 0 : index
      %c0_61 = arith.constant 0 : index
      %89 = vector.load %arg9[%c0_60, %c0_61] : memref<64x1xf32, #tpu.memory_space<vmem>>, vector<64x1xf32>
      tpu.vector_store %arg9[%c0_60, %c0_61], %88 {strides = array<i32>} : memref<64x1xf32, #tpu.memory_space<vmem>>, vector<64x1xf32>,
      %cst_62 = arith.constant 0.000000e+00 : f32
      %90 = vector.broadcast %cst_62 : f32 to vector<64x8xf32>
      %c0_63 = arith.constant 0 : index
      %c0_64 = arith.constant 0 : index
      %91 = vector.load %arg10[%c0_63, %c0_64] : memref<64x8xf32, #tpu.memory_space<vmem>>, vector<64x8xf32>
      tpu.vector_store %arg10[%c0_63, %c0_64], %90 {strides = array<i32>} : memref<64x8xf32, #tpu.memory_space<vmem>>, vector<64x8xf32>,
    } else {
    }
    %7 = tpu.iota {dimensions = array<i32: 1>} : vector<2x16x16xi32>
    %8 = vector.shape_cast %7 : vector<2x16x16xi32> to vector<32x16xi32>
    %9 = tpu.iota {dimensions = array<i32: 1>} : vector<32x16xi32>
    %c16_i32 = arith.constant 16 : i32
    %10 = arith.muli %3, %c16_i32 : i32
    %11 = vector.broadcast %10 : i32 to vector<32x16xi32>
    %12 = arith.addi %11, %9 : vector<32x16xi32>
    %c16_i32_1 = arith.constant 16 : i32
    %13 = arith.muli %1, %c16_i32_1 : i32
    %14 = vector.broadcast %13 : i32 to vector<32x16xi32>
    %15 = arith.addi %14, %8 : vector<32x16xi32>
    %16 = arith.cmpi sle, %12, %15 : vector<32x16xi32>
    %c0 = arith.constant 0 : index
    %c0_2 = arith.constant 0 : index
    %c0_3 = arith.constant 0 : index
    %c0_4 = arith.constant 0 : index
    %17 = vector.load %arg4[%c0, %c0_2, %c0_3, %c0_4] : memref<1x4x16x8xbf16, #tpu.memory_space<vmem>>, vector<1x2x16x8xbf16>
    %18 = vector.shape_cast %17 : vector<1x2x16x8xbf16> to vector<2x16x8xbf16>
    %19 = vector.shape_cast %18 : vector<2x16x8xbf16> to vector<32x8xbf16>
    %c0_5 = arith.constant 0 : index
    %c0_6 = arith.constant 0 : index
    %c0_7 = arith.constant 0 : index
    %c0_8 = arith.constant 0 : index
    %20 = vector.load %arg5[%c0_5, %c0_6, %c0_7, %c0_8] : memref<1x2x16x8xbf16, #tpu.memory_space<vmem>>, vector<1x1x16x8xbf16>
    %21 = vector.shape_cast %20 : vector<1x1x16x8xbf16> to vector<16x8xbf16>
    %cst = arith.constant dense<0.000000e+00> : vector<32x16xf32>
    %22 = tpu.matmul %19, %21, %cst {dimension_numbers = #tpu.dot_dimension_numbers<[1], [1], [0], [0], [0, 0, 1, 0], [], []>} : vector<32x8xbf16>, vector<16x8xbf16>, vector<32x16xf32> -> vector<32x16xf32>
    %cst_9 = arith.constant -1.000000e+30 : f32
    %23 = vector.broadcast %cst_9 : f32 to vector<32x16xf32>
    %24 = arith.select %16, %22, %23 : vector<32x16xi1>, vector<32x16xf32>
    %c0_10 = arith.constant 0 : index
    %c0_11 = arith.constant 0 : index
    %25 = vector.load %arg8[%c0_10, %c0_11] : memref<64x1xf32, #tpu.memory_space<vmem>>, vector<32x1xf32>
    %cst_12 = arith.constant dense<0xFF800000> : vector<32xf32>
    %26 = vector.multi_reduction <maximumf>, %24, %cst_12 [1] : vector<32x16xf32> to vector<32xf32>
    %27 = vector.shape_cast %26 : vector<32xf32> to vector<32x1xf32>
    %28 = arith.maximumf %25, %27 : vector<32x1xf32>
    %29 = arith.subf %25, %28 : vector<32x1xf32>
    %30 = math.exp %29 : vector<32x1xf32>
    %31 = vector.broadcast %28 : vector<32x1xf32> to vector<32x16xf32>
    %32 = arith.subf %24, %31 : vector<32x16xf32>
    %33 = math.exp %32 : vector<32x16xf32>
    %c0_13 = arith.constant 0 : index
    %c0_14 = arith.constant 0 : index
    %34 = vector.load %arg9[%c0_13, %c0_14] : memref<64x1xf32, #tpu.memory_space<vmem>>, vector<32x1xf32>
    %35 = arith.mulf %30, %34 : vector<32x1xf32>
    %cst_15 = arith.constant dense<0.000000e+00> : vector<32xf32>
    %36 = vector.multi_reduction <add>, %33, %cst_15 [1] : vector<32x16xf32> to vector<32xf32>
    %37 = vector.shape_cast %36 : vector<32xf32> to vector<32x1xf32>
    %38 = arith.addf %35, %37 : vector<32x1xf32>
    %c0_16 = arith.constant 0 : index
    %c0_17 = arith.constant 0 : index
    %39 = vector.load %arg9[%c0_16, %c0_17] : memref<64x1xf32, #tpu.memory_space<vmem>>, vector<32x1xf32>
    tpu.vector_store %arg9[%c0_16, %c0_17], %38 {strides = array<i32>} : memref<64x1xf32, #tpu.memory_space<vmem>>, vector<32x1xf32>,
    %c0_18 = arith.constant 0 : index
    %c0_19 = arith.constant 0 : index
    %40 = vector.load %arg10[%c0_18, %c0_19] : memref<64x8xf32, #tpu.memory_space<vmem>>, vector<32x8xf32>
    %41 = vector.broadcast %30 : vector<32x1xf32> to vector<32x8xf32>
    %42 = arith.mulf %41, %40 : vector<32x8xf32>
    %43 = arith.truncf %33 : vector<32x16xf32> to vector<32x16xbf16>
    %c0_20 = arith.constant 0 : index
    %c0_21 = arith.constant 0 : index
    %c0_22 = arith.constant 0 : index
    %c0_23 = arith.constant 0 : index
    %44 = vector.load %arg6[%c0_20, %c0_21, %c0_22, %c0_23] : memref<1x2x16x8xbf16, #tpu.memory_space<vmem>>, vector<1x1x16x8xbf16>
    %45 = vector.shape_cast %44 : vector<1x1x16x8xbf16> to vector<16x8xbf16>
    %cst_24 = arith.constant dense<0.000000e+00> : vector<32x8xf32>
    %46 = tpu.matmul %43, %45, %cst_24 {dimension_numbers = #tpu.dot_dimension_numbers<[1], [0], [0], [1], [0, 0, 1, 1], [], []>} : vector<32x16xbf16>, vector<16x8xbf16>, vector<32x8xf32> -> vector<32x8xf32>
    %47 = arith.addf %42, %46 : vector<32x8xf32>
    %c0_25 = arith.constant 0 : index
    %c0_26 = arith.constant 0 : index
    %48 = vector.load %arg10[%c0_25, %c0_26] : memref<64x8xf32, #tpu.memory_space<vmem>>, vector<32x8xf32>
    tpu.vector_store %arg10[%c0_25, %c0_26], %47 {strides = array<i32>} : memref<64x8xf32, #tpu.memory_space<vmem>>, vector<32x8xf32>,
    %c0_27 = arith.constant 0 : index
    %c0_28 = arith.constant 0 : index
    %49 = vector.load %arg8[%c0_27, %c0_28] : memref<64x1xf32, #tpu.memory_space<vmem>>, vector<32x1xf32>
    tpu.vector_store %arg8[%c0_27, %c0_28], %28 {strides = array<i32>} : memref<64x1xf32, #tpu.memory_space<vmem>>, vector<32x1xf32>,
    %c0_29 = arith.constant 0 : index
    %c2 = arith.constant 2 : index
    %c0_30 = arith.constant 0 : index
    %c0_31 = arith.constant 0 : index
    %50 = vector.load %arg4[%c0_29, %c2, %c0_30, %c0_31] : memref<1x4x16x8xbf16, #tpu.memory_space<vmem>>, vector<1x2x16x8xbf16>
    %51 = vector.shape_cast %50 : vector<1x2x16x8xbf16> to vector<2x16x8xbf16>
    %52 = vector.shape_cast %51 : vector<2x16x8xbf16> to vector<32x8xbf16>
    %c0_32 = arith.constant 0 : index
    %c1 = arith.constant 1 : index
    %c0_33 = arith.constant 0 : index
    %c0_34 = arith.constant 0 : index
    %53 = vector.load %arg5[%c0_32, %c1, %c0_33, %c0_34] : memref<1x2x16x8xbf16, #tpu.memory_space<vmem>>, vector<1x1x16x8xbf16>
    %54 = vector.shape_cast %53 : vector<1x1x16x8xbf16> to vector<16x8xbf16>
    %cst_35 = arith.constant dense<0.000000e+00> : vector<32x16xf32>
    %55 = tpu.matmul %52, %54, %cst_35 {dimension_numbers = #tpu.dot_dimension_numbers<[1], [1], [0], [0], [0, 0, 1, 0], [], []>} : vector<32x8xbf16>, vector<16x8xbf16>, vector<32x16xf32> -> vector<32x16xf32>
    %cst_36 = arith.constant -1.000000e+30 : f32
    %56 = vector.broadcast %cst_36 : f32 to vector<32x16xf32>
    %57 = arith.select %16, %55, %56 : vector<32x16xi1>, vector<32x16xf32>
    %c32 = arith.constant 32 : index
    %c0_37 = arith.constant 0 : index
    %58 = vector.load %arg8[%c32, %c0_37] : memref<64x1xf32, #tpu.memory_space<vmem>>, vector<32x1xf32>
    %cst_38 = arith.constant dense<0xFF800000> : vector<32xf32>
    %59 = vector.multi_reduction <maximumf>, %57, %cst_38 [1] : vector<32x16xf32> to vector<32xf32>
    %60 = vector.shape_cast %59 : vector<32xf32> to vector<32x1xf32>
    %61 = arith.maximumf %58, %60 : vector<32x1xf32>
    %62 = arith.subf %58, %61 : vector<32x1xf32>
    %63 = math.exp %62 : vector<32x1xf32>
    %64 = vector.broadcast %61 : vector<32x1xf32> to vector<32x16xf32>
    %65 = arith.subf %57, %64 : vector<32x16xf32>
    %66 = math.exp %65 : vector<32x16xf32>
    %c32_39 = arith.constant 32 : index
    %c0_40 = arith.constant 0 : index
    %67 = vector.load %arg9[%c32_39, %c0_40] : memref<64x1xf32, #tpu.memory_space<vmem>>, vector<32x1xf32>
    %68 = arith.mulf %63, %67 : vector<32x1xf32>
    %cst_41 = arith.constant dense<0.000000e+00> : vector<32xf32>
    %69 = vector.multi_reduction <add>, %66, %cst_41 [1] : vector<32x16xf32> to vector<32xf32>
    %70 = vector.shape_cast %69 : vector<32xf32> to vector<32x1xf32>
    %71 = arith.addf %68, %70 : vector<32x1xf32>
    %c32_42 = arith.constant 32 : index
    %c0_43 = arith.constant 0 : index
    %72 = vector.load %arg9[%c32_42, %c0_43] : memref<64x1xf32, #tpu.memory_space<vmem>>, vector<32x1xf32>
    tpu.vector_store %arg9[%c32_42, %c0_43], %71 {strides = array<i32>} : memref<64x1xf32, #tpu.memory_space<vmem>>, vector<32x1xf32>,
    %c32_44 = arith.constant 32 : index
    %c0_45 = arith.constant 0 : index
    %73 = vector.load %arg10[%c32_44, %c0_45] : memref<64x8xf32, #tpu.memory_space<vmem>>, vector<32x8xf32>
    %74 = vector.broadcast %63 : vector<32x1xf32> to vector<32x8xf32>
    %75 = arith.mulf %74, %73 : vector<32x8xf32>
    %76 = arith.truncf %66 : vector<32x16xf32> to vector<32x16xbf16>
    %c0_46 = arith.constant 0 : index
    %c1_47 = arith.constant 1 : index
    %c0_48 = arith.constant 0 : index
    %c0_49 = arith.constant 0 : index
    %77 = vector.load %arg6[%c0_46, %c1_47, %c0_48, %c0_49] : memref<1x2x16x8xbf16, #tpu.memory_space<vmem>>, vector<1x1x16x8xbf16>
    %78 = vector.shape_cast %77 : vector<1x1x16x8xbf16> to vector<16x8xbf16>
    %cst_50 = arith.constant dense<0.000000e+00> : vector<32x8xf32>
    %79 = tpu.matmul %76, %78, %cst_50 {dimension_numbers = #tpu.dot_dimension_numbers<[1], [0], [0], [1], [0, 0, 1, 1], [], []>} : vector<32x16xbf16>, vector<16x8xbf16>, vector<32x8xf32> -> vector<32x8xf32>
    %80 = arith.addf %75, %79 : vector<32x8xf32>
    %c32_51 = arith.constant 32 : index
    %c0_52 = arith.constant 0 : index
    %81 = vector.load %arg10[%c32_51, %c0_52] : memref<64x8xf32, #tpu.memory_space<vmem>>, vector<32x8xf32>
    tpu.vector_store %arg10[%c32_51, %c0_52], %80 {strides = array<i32>} : memref<64x8xf32, #tpu.memory_space<vmem>>, vector<32x8xf32>,
    %c32_53 = arith.constant 32 : index
    %c0_54 = arith.constant 0 : index
    %82 = vector.load %arg8[%c32_53, %c0_54] : memref<64x1xf32, #tpu.memory_space<vmem>>, vector<32x1xf32>
    tpu.vector_store %arg8[%c32_53, %c0_54], %61 {strides = array<i32>} : memref<64x1xf32, #tpu.memory_space<vmem>>, vector<32x1xf32>,
    %83 = arith.cmpi eq, %3, %1 : i32
    %84 = arith.extui %83 : i1 to i32
    %c0_i32_55 = arith.constant 0 : i32
    %85 = arith.cmpi ne, %84, %c0_i32_55 : i32
    scf.if %85 {
      %c0_56 = arith.constant 0 : index
      %c0_57 = arith.constant 0 : index
      %86 = vector.load %arg10[%c0_56, %c0_57] : memref<64x8xf32, #tpu.memory_space<vmem>>, vector<64x8xf32>
      %c0_58 = arith.constant 0 : index
      %c0_59 = arith.constant 0 : index
      %87 = vector.load %arg9[%c0_58, %c0_59] : memref<64x1xf32, #tpu.memory_space<vmem>>, vector<64x1xf32>
      %88 = tpu.reciprocal %87 {approx = true} : vector<64x1xf32> -> vector<64x1xf32>
      %89 = vector.broadcast %88 : vector<64x1xf32> to vector<64x8xf32>
      %90 = arith.mulf %86, %89 : vector<64x8xf32>
      %91 = vector.extract_strided_slice %90 {offsets = [0, 0], sizes = [16, 8], strides = [1, 1]} : vector<64x8xf32> to vector<16x8xf32>
      %92 = arith.truncf %91 : vector<16x8xf32> to vector<16x8xbf16>
      %c0_60 = arith.constant 0 : index
      %c0_61 = arith.constant 0 : index
      %c0_62 = arith.constant 0 : index
      %93 = vector.load %arg7[%c0_60, %c0_61, %c0_62] : memref<1x16x32xbf16, #tpu.memory_space<vmem>>, vector<1x16x8xbf16>
      %94 = vector.shape_cast %93 : vector<1x16x8xbf16> to vector<16x8xbf16>
      %95 = vector.shape_cast %92 : vector<16x8xbf16> to vector<1x16x8xbf16>
      tpu.vector_store %arg7[%c0_60, %c0_61, %c0_62], %95 {strides = array<i32>} : memref<1x16x32xbf16, #tpu.memory_space<vmem>>, vector<1x16x8xbf16>,
      %96 = vector.extract_strided_slice %90 {offsets = [16, 0], sizes = [16, 8], strides = [1, 1]} : vector<64x8xf32> to vector<16x8xf32>
      %97 = arith.truncf %96 : vector<16x8xf32> to vector<16x8xbf16>
      %c0_63 = arith.constant 0 : index
      %c0_64 = arith.constant 0 : index
      %c8 = arith.constant 8 : index
      %98 = vector.load %arg7[%c0_63, %c0_64, %c8] : memref<1x16x32xbf16, #tpu.memory_space<vmem>>, vector<1x16x8xbf16>
      %99 = vector.shape_cast %98 : vector<1x16x8xbf16> to vector<16x8xbf16>
      %100 = vector.shape_cast %97 : vector<16x8xbf16> to vector<1x16x8xbf16>
      tpu.vector_store %arg7[%c0_63, %c0_64, %c8], %100 {strides = array<i32>} : memref<1x16x32xbf16, #tpu.memory_space<vmem>>, vector<1x16x8xbf16>,
      %101 = vector.extract_strided_slice %90 {offsets = [32, 0], sizes = [16, 8], strides = [1, 1]} : vector<64x8xf32> to vector<16x8xf32>
      %102 = arith.truncf %101 : vector<16x8xf32> to vector<16x8xbf16>
      %c0_65 = arith.constant 0 : index
      %c0_66 = arith.constant 0 : index
      %c16 = arith.constant 16 : index
      %103 = vector.load %arg7[%c0_65, %c0_66, %c16] : memref<1x16x32xbf16, #tpu.memory_space<vmem>>, vector<1x16x8xbf16>
      %104 = vector.shape_cast %103 : vector<1x16x8xbf16> to vector<16x8xbf16>
      %105 = vector.shape_cast %102 : vector<16x8xbf16> to vector<1x16x8xbf16>
      tpu.vector_store %arg7[%c0_65, %c0_66, %c16], %105 {strides = array<i32>} : memref<1x16x32xbf16, #tpu.memory_space<vmem>>, vector<1x16x8xbf16>,
      %106 = vector.extract_strided_slice %90 {offsets = [48, 0], sizes = [16, 8], strides = [1, 1]} : vector<64x8xf32> to vector<16x8xf32>
      %107 = arith.truncf %106 : vector<16x8xf32> to vector<16x8xbf16>
      %c0_67 = arith.constant 0 : index
      %c0_68 = arith.constant 0 : index
      %c24 = arith.constant 24 : index
      %108 = vector.load %arg7[%c0_67, %c0_68, %c24] : memref<1x16x32xbf16, #tpu.memory_space<vmem>>, vector<1x16x8xbf16>
      %109 = vector.shape_cast %108 : vector<1x16x8xbf16> to vector<16x8xbf16>
      %110 = vector.shape_cast %107 : vector<16x8xbf16> to vector<1x16x8xbf16>
      tpu.vector_store %arg7[%c0_67, %c0_68, %c24], %110 {strides = array<i32>} : memref<1x16x32xbf16, #tpu.memory_space<vmem>>, vector<1x16x8xbf16>,
    } else {
    }
    return
  }
  func.func @transform_0(%arg0: i32, %arg1: i32, %arg2: memref<1xi32, #tpu.memory_space<smem>>, %arg3: memref<1xi32, #tpu.memory_space<smem>>) -> (i32, i32, i32, i32) {
    %0 = arith.index_cast %arg1 : i32 to index
    %1 = memref.load %arg2[%0] : memref<1xi32, #tpu.memory_space<smem>>
    %c0_i32 = arith.constant 0 : i32
    %c0_i32_0 = arith.constant 0 : i32
    %c0_i32_1 = arith.constant 0 : i32
    return %arg0, %c0_i32, %1, %c0_i32_0 : i32, i32, i32, i32
  }
  func.func @transform_1(%arg0: i32, %arg1: i32, %arg2: memref<1xi32, #tpu.memory_space<smem>>, %arg3: memref<1xi32, #tpu.memory_space<smem>>) -> (i32, i32, i32, i32) {
    %0 = arith.index_cast %arg1 : i32 to index
    %1 = memref.load %arg3[%0] : memref<1xi32, #tpu.memory_space<smem>>
    %c0_i32 = arith.constant 0 : i32
    %c0_i32_0 = arith.constant 0 : i32
    %c0_i32_1 = arith.constant 0 : i32
    return %arg0, %c0_i32, %1, %c0_i32_0 : i32, i32, i32, i32
  }
  func.func @transform_2(%arg0: i32, %arg1: i32, %arg2: memref<1xi32, #tpu.memory_space<smem>>, %arg3: memref<1xi32, #tpu.memory_space<smem>>) -> (i32, i32, i32, i32) {
    %0 = arith.index_cast %arg1 : i32 to index
    %1 = memref.load %arg3[%0] : memref<1xi32, #tpu.memory_space<smem>>
    %c0_i32 = arith.constant 0 : i32
    %c0_i32_0 = arith.constant 0 : i32
    %c0_i32_1 = arith.constant 0 : i32
    return %arg0, %c0_i32, %1, %c0_i32_0 : i32, i32, i32, i32
  }
  func.func @transform_3(%arg0: i32, %arg1: i32, %arg2: memref<1xi32, #tpu.memory_space<smem>>, %arg3: memref<1xi32, #tpu.memory_space<smem>>) -> (i32, i32, i32) {
    %0 = arith.index_cast %arg1 : i32 to index
    %1 = memref.load %arg2[%0] : memref<1xi32, #tpu.memory_space<smem>>
    %c0_i32 = arith.constant 0 : i32
    %c0_i32_0 = arith.constant 0 : i32
    return %arg0, %1, %c0_i32 : i32, i32, i32
  }
}

</mosaic_0001>

<llo_original>
// kernel: gqa_forward.5
$region0: #{gqa_forward.5}
  #allocation0 [shape = 'u32[]', space=smem, size = 0x4, offset = 0x4, fixed_abs, tag = 'smem constant byte address 0x4 - core index']
  #allocation1 [shape = 'u32[144,128]{1,0:T(1,128)}', space=vmem, size = 0x12000, scoped, tag = 'internal scratch']
  #allocation2 [shape = 'f32[32,128]{1,0:T(8,128)}', space=vmem, size = 0x4000, scoped, tag = 'scratch operand']
  %s0 = inlined_call_operand.vmem [shape: bf16[32,128], index: 0, kind: input, shape index: {}]
  %s1 = inlined_call_operand.vmem [shape: bf16[128,128], index: 1, kind: input, shape index: {}]
  %s2 = inlined_call_operand.vmem [shape: f32[1,128], index: 2, kind: input, shape index: {}]
  %s3 = inlined_call_operand.vmem [shape: f32[32,128], index: 3, kind: output, shape index: {}]
  %s4 = sld [smem:[#allocation0]]
  $region30: #{gqa_forward.5} parent=0
    _
  %s6 = ssub.s32 1, %s4
  %s7 = scalar_select 0, %s6, %s4
  // Predicated region
  $region2: #{gqa_forward.5} parent=0 // pred_check
    _
  $region3: #{gqa_forward.5} parent=0 // pred_check_branch
    %9 = sbr.rel (0) target = $region5
  $region4: #{gqa_forward.5} parent=0 // pred_region
    _
  $region5: #{gqa_forward.5} parent=0 // pred_fallthru
    _
  // Predicated region
  $region6: #{gqa_forward.5} parent=0 // pred_check
    _
  $region7: #{gqa_forward.5} parent=0 // pred_check_branch
    %11 = sbr.rel (0) target = $region9
  $region8: #{gqa_forward.5} parent=0 // pred_region
    _
  $region9: #{gqa_forward.5} parent=0 // pred_fallthru
    _
  // Predicated region
  $region10: #{gqa_forward.5} parent=0 // pred_check
    _
  $region11: #{gqa_forward.5} parent=0 // pred_check_branch
    %13 = sbr.rel (0) target = $region13
  $region12: #{gqa_forward.5} parent=0 // pred_region
    _
  $region13: #{gqa_forward.5} parent=0 // pred_fallthru
    _
  %p15 = scmp.eq.s32.totalorder 0, 0
  // Predicated region
  $region14: #{gqa_forward.5} parent=0 // pred_check
    %p16 = pneg %p15
  $region15: #{gqa_forward.5} parent=0 // pred_check_branch
    %18 = sbr.rel (%p16) target = $region17
  $region16: #{gqa_forward.5} parent=0 // pred_region
    %19 = vst [vmem:[#allocation2] sm:$0xff] 0.0
    %20 = vst [vmem:[#allocation2 + $0x8] sm:$0xff] 0.0
    %21 = vst [vmem:[#allocation2 + $0x10] sm:$0xff] 0.0
    %22 = vst [vmem:[#allocation2 + $0x18] sm:$0xff] 0.0
  $region17: #{gqa_forward.5} parent=0 // pred_fallthru
    _
  %v23 = vld [vmem:[#allocation2] sm:$0xff]
  %v24 = vld [vmem:[#allocation2 + $0x8] sm:$0xff]
  %v25 = vld [vmem:[#allocation2 + $0x10] sm:$0xff]
  %v26 = vld [vmem:[#allocation2 + $0x18] sm:$0xff]
  %v27 = vld [vmem:[%s0] sm:$0xf]
  %v28 = vld [vmem:[%s0 + $0x4] sm:$0xf]
  %v29 = vld [vmem:[%s0 + $0x8] sm:$0xf]
  %v30 = vld [vmem:[%s0 + $0xc] sm:$0xf]
  %v31 = vld [vmem:[%s1] sm:$0xf]
  %v32 = vld [vmem:[%s1 + $0x4] sm:$0xf]
  %v33 = vld [vmem:[%s1 + $0x8] sm:$0xf]
  %v34 = vld [vmem:[%s1 + $0xc] sm:$0xf]
  %v35 = vld [vmem:[%s1 + $0x10] sm:$0xf]
  %v36 = vld [vmem:[%s1 + $0x14] sm:$0xf]
  %v37 = vld [vmem:[%s1 + $0x18] sm:$0xf]
  %v38 = vld [vmem:[%s1 + $0x1c] sm:$0xf]
  %v39 = vld [vmem:[%s1 + $0x20] sm:$0xf]
  %v40 = vld [vmem:[%s1 + $0x24] sm:$0xf]
  %v41 = vld [vmem:[%s1 + $0x28] sm:$0xf]
  %v42 = vld [vmem:[%s1 + $0x2c] sm:$0xf]
  %v43 = vld [vmem:[%s1 + $0x30] sm:$0xf]
  %v44 = vld [vmem:[%s1 + $0x34] sm:$0xf]
  %v45 = vld [vmem:[%s1 + $0x38] sm:$0xf]
  %v46 = vld [vmem:[%s1 + $0x3c] sm:$0xf]
  %v51 = vunpack.c.l.b16 %v27
  %v52 = vunpack.c.l.b16 %v28
  %v53 = vunpack.c.l.b16 %v29
  %v54 = vunpack.c.l.b16 %v30
  %v55 = vpack.c.b16 %v52, %v51
  %v56 = vpack.c.b16 %v54, %v53
  %v75 = vunpack.c.l.b16 %v31
  %v76 = vunpack.c.l.b16 %v32
  %v77 = vunpack.c.l.b16 %v33
  %v78 = vunpack.c.l.b16 %v34
  %v79 = vunpack.c.l.b16 %v35
  %v80 = vunpack.c.l.b16 %v36
  %v81 = vunpack.c.l.b16 %v37
  %v82 = vunpack.c.l.b16 %v38
  %v83 = vunpack.c.l.b16 %v39
  %v84 = vunpack.c.l.b16 %v40
  %v85 = vunpack.c.l.b16 %v41
  %v86 = vunpack.c.l.b16 %v42
  %v87 = vunpack.c.l.b16 %v43
  %v88 = vunpack.c.l.b16 %v44
  %v89 = vunpack.c.l.b16 %v45
  %v90 = vunpack.c.l.b16 %v46
  %v91 = vpack.c.b16 %v76, %v75
  %v92 = vpack.c.b16 %v78, %v77
  %v93 = vpack.c.b16 %v80, %v79
  %v94 = vpack.c.b16 %v82, %v81
  %v95 = vpack.c.b16 %v84, %v83
  %v96 = vpack.c.b16 %v86, %v85
  %v97 = vpack.c.b16 %v88, %v87
  %v98 = vpack.c.b16 %v90, %v89
  %107 = vmatprep.subr.bf16.mxu0 0
  %108 = vmatpush1.bf16.msra.mxu0 %v91
  %109 = vmatprep.subr.bf16.mxu0 0
  %110 = vmatpush1.bf16.msra.mxu0 %v92
  %111 = vmatprep.subr.bf16.mxu0 0
  %112 = vmatpush1.bf16.msra.mxu0 %v93
  %113 = vmatprep.subr.bf16.mxu0 0
  %114 = vmatpush1.bf16.msra.mxu0 %v94
  %115 = vmatprep.subr.bf16.mxu0 0
  %116 = vmatpush1.bf16.msra.mxu0 %v95
  %117 = vmatprep.subr.bf16.mxu0 0
  %118 = vmatpush1.bf16.msra.mxu0 %v96
  %119 = vmatprep.subr.bf16.mxu0 0
  %120 = vmatpush1.bf16.msra.mxu0 %v97
  %121 = vmatprep.subr.bf16.mxu0 0
  %122 = vmatpush1.bf16.msra.mxu0 %v98
  %123 = vmatprep.subr.bf16.mxu0 0
  %124 = vmatpush1.bf16.msra.mxu0 0
  %125 = vmatprep.subr.bf16.mxu0 0
  %126 = vmatpush1.bf16.msra.mxu0 0
  %127 = vmatprep.subr.bf16.mxu0 0
  %128 = vmatpush1.bf16.msra.mxu0 0
  %129 = vmatprep.subr.bf16.mxu0 0
  %130 = vmatpush1.bf16.msra.mxu0 0
  %131 = vmatprep.subr.bf16.mxu0 0
  %132 = vmatpush1.bf16.msra.mxu0 0
  %133 = vmatprep.subr.bf16.mxu0 0
  %134 = vmatpush1.bf16.msra.mxu0 0
  %135 = vmatprep.subr.bf16.mxu0 0
  %136 = vmatpush1.bf16.msra.mxu0 0
  %137 = vmatprep.subr.bf16.mxu0 0
  %138 = vmatpush1.bf16.msra.mxu0 0
  %139 = vmatprep.mubr.bf16.mxu0 0
  %140 = vmatmul.mubr.bf16.gmra.mrb[0].mxu0 %v55
  %v141 = vpop.f32.mrb[0].mxu0
  %v142 = vadd.f32 0.0, %v141
  %v143 = vpop.f32.mrb[0].mxu0
  %v144 = vpop.f32.mrb[0].mxu0
  %v145 = vadd.f32 0.0, %v144
  %v146 = vpop.f32.mrb[0].mxu0
  %147 = vmatprep.mubr.bf16.mxu0 0
  %148 = vmatmul.mubr.bf16.gmra.mrb[0].mxu0 %v56
  %v149 = vpop.f32.mrb[0].mxu0
  %v150 = vadd.f32 0.0, %v149
  %v151 = vpop.f32.mrb[0].mxu0
  %v152 = vpop.f32.mrb[0].mxu0
  %v153 = vadd.f32 0.0, %v152
  %v154 = vpop.f32.mrb[0].mxu0
  %155 = vdwg.mxu0
  %v156 = vadd.f32 %v23, %v142
  %v157 = vadd.f32 %v24, %v145
  %v158 = vadd.f32 %v25, %v150
  %v159 = vadd.f32 %v26, %v153
  %160 = vst [vmem:[#allocation2] sm:$0xff] %v156
  %161 = vst [vmem:[#allocation2 + $0x8] sm:$0xff] %v157
  %162 = vst [vmem:[#allocation2 + $0x10] sm:$0xff] %v158
  %163 = vst [vmem:[#allocation2 + $0x18] sm:$0xff] %v159
  // Predicated region
  $region18: #{gqa_forward.5} parent=0 // pred_check
    %p164 = pneg %p15
  $region19: #{gqa_forward.5} parent=0 // pred_check_branch
    %166 = sbr.rel (%p164) target = $region21
  $region20: #{gqa_forward.5} parent=0 // pred_region
    %v167 = vld [vmem:[#allocation2] sm:$0xff]
    %v168 = vld [vmem:[#allocation2 + $0x8] sm:$0xff]
    %v169 = vld [vmem:[#allocation2 + $0x10] sm:$0xff]
    %v170 = vld [vmem:[#allocation2 + $0x18] sm:$0xff]
    %v171 = vld [vmem:[%s2] sm:$0x1]
    %v173 = vlaneseq
    %v174 = vshrl.u32 %v173, 7
    %v175 = vsub.s32 0, %v174
    %v176 = vrot.slane %v171, %v175
    %v178 = vadd.f32 %v167, %v176
    %v179 = vadd.f32 %v168, %v176
    %v180 = vadd.f32 %v169, %v176
    %v181 = vadd.f32 %v170, %v176
    %182 = vst [vmem:[%s3] sm:$0xff] %v178
    %183 = vst [vmem:[%s3 + $0x8] sm:$0xff] %v179
    %184 = vst [vmem:[%s3 + $0x10] sm:$0xff] %v180
    %185 = vst [vmem:[%s3 + $0x18] sm:$0xff] %v181
  $region21: #{gqa_forward.5} parent=0 // pred_fallthru
    _
  // Predicated region
  $region22: #{gqa_forward.5} parent=0 // pred_check
    _
  $region23: #{gqa_forward.5} parent=0 // pred_check_branch
    %187 = sbr.rel (0) target = $region25
  $region24: #{gqa_forward.5} parent=0 // pred_region
    _
  $region25: #{gqa_forward.5} parent=0 // pred_fallthru
    _
  // Predicated region
  $region26: #{gqa_forward.5} parent=0 // pred_check
    _
  $region27: #{gqa_forward.5} parent=0 // pred_check_branch
    %189 = sbr.rel (0) target = $region29
  $region28: #{gqa_forward.5} parent=0 // pred_region
    _
  $region29: #{gqa_forward.5} parent=0 // pred_fallthru
    _

// kernel: gqa_forward.3
$region0: #{gqa_forward.3}
  #allocation0 [shape = 'u32[]', space=smem, size = 0x4, offset = 0x4, fixed_abs, tag = 'smem constant byte address 0x4 - core index']
  #allocation1 [shape = 'u32[144,128]{1,0:T(1,128)}', space=vmem, size = 0x12000, scoped, tag = 'internal scratch']
  #allocation2 [shape = 'f32[16,64]{1,0:T(8,128)}', space=vmem, size = 0x2000, scoped, tag = 'scratch operand']
  %s0 = inlined_call_operand.vmem [shape: bf16[2,16,128], index: 0, kind: input, shape index: {}]
  %s1 = inlined_call_operand.vmem [shape: bf16[128,64], index: 1, kind: input, shape index: {}]
  %s2 = inlined_call_operand.vmem [shape: f32[1,64], index: 2, kind: input, shape index: {}]
  %s3 = inlined_call_operand.vmem [shape: bf16[2,4,16,8], index: 3, kind: output, shape index: {0}]
  %s4 = inlined_call_operand.vmem [shape: bf16[2,2,16,8], index: 4, kind: output, shape index: {1}]
  %s5 = inlined_call_operand.vmem [shape: bf16[2,2,16,8], index: 5, kind: output, shape index: {2}]
  %6 = xla_tuple %s3, %s4, %s5
  %s7 = sld [smem:[#allocation0]]
  $region69: #{gqa_forward.3} parent=0
    _
  %s9 = ssub.s32 1, %s7
  %s10 = scalar_select 0, %s9, %s7
  loop: start=0, step=1, limit=4
  $region2: #{gqa_forward.3} parent=0 // loop_pre_header
    _
  $region3: #{gqa_forward.3} parent=0 // loop_header
    %s12 = sphi 0, %s16
    %p13 = scmp.ge.s32.totalorder %s12, 4
    %s19 = sphi 0, %s38
    %s20 = sphi 0, %s34
    %s21 = sphi 0, %s30
    %s22 = sphi 0, %s19
    %s23 = sphi 0, %s20
    %s24 = sphi 0, %s21
    %s25 = sphi 0, %s22
    %s26 = sphi 0, %s23
    %s27 = sphi 0, %s24
    %s45 = sphi 0, %s47
    %s48 = sphi 0, %s45
    %s49 = sphi 0, %s48
    %s65 = sphi 0, %s49
    %s71 = sphi 0, %s73
    %s74 = sphi 0, %s71
    %s75 = sphi 0, %s74
    %s91 = sphi 0, %s75
    %s95 = sphi 0, %s95
    %s97 = sphi 0, %s95
    %s98 = sphi 0, %s97
    %s112 = sphi 0, %s98
    %s120 = sphi 0, %s122
    %s123 = sphi 0, %s120
    %s124 = sphi 0, %s123
    %s140 = sphi 0, %s124
    %s148 = sphi 0, %s150
    %s151 = sphi 0, %s148
    %s152 = sphi 0, %s151
    %s168 = sphi 0, %s152
    %s176 = sphi 0, %s178
    %s179 = sphi 0, %s176
    %s180 = sphi 0, %s179
    %s196 = sphi 0, %s180
  $region4: #{gqa_forward.3} parent=0 // loop_header_branch
    %15 = sbr.rel (%p13) target = $region8
  $region5: #{gqa_forward.3} parent=0 // loop_body
    %s17 = ssub.s32 %s12, 1
    %s18 = ssub.s32 %s12, 2
    %s28 = sadd.s32 1, %s21
    %p29 = scmp.ge.s32.totalorder %s28, 1
    %s30 = scalar_select %p29, 0, %s28
    %s31 = sadd.s32 1, %s20
    %s32 = scalar_select %p29, %s31, %s20
    %p33 = scmp.ge.s32.totalorder %s32, 1
    %s34 = scalar_select %p33, 0, %s32
    %s35 = sadd.s32 1, %s19
    %s36 = scalar_select %p33, %s35, %s19
    %p37 = scmp.ge.s32.totalorder %s36, 2
    %s38 = scalar_select %p37, 0, %s36
    %s39 = ssub.s32 %s19, %s38
    %s40 = ssub.s32 %s20, %s34
    %s41 = sor.u32 %s39, %s40
    %s42 = ssub.s32 %s21, %s30
    %s43 = sor.u32 %s41, %s42
    %p44 = scmp.eq.s32.totalorder %s43, 0
    %s46 = sadd.s32 %s45, 1
    %s47 = scalar_select %p44, %s45, %s46
    %p50 = pneg %p44
    %p51 = scmp.eq.s32.totalorder %s12, 1
    %p52 = por %p50, %p51
    %p53 = scmp.ne.s32.totalorder %s45, %s48
    %p54 = scmp.eq.s32.totalorder %s12, 0
    %p55 = por %p53, %p54
    %p56 = scmp.ne.s32.totalorder %s45, %s48
    %p57 = scmp.eq.s32.totalorder %s17, 1
    %p58 = por %p56, %p57
    %p59 = scmp.ne.s32.totalorder %s48, %s49
    %p60 = scmp.eq.s32.totalorder %s17, 0
    %p61 = por %p59, %p60
    %p62 = scmp.ne.s32.totalorder %s48, %s49
    %p63 = scmp.eq.s32.totalorder %s18, 1
    %p64 = por %p62, %p63
    %p66 = scmp.ne.s32.totalorder %s49, %s65
    %p67 = scmp.eq.s32.totalorder %s18, 0
    %p68 = por %p66, %p67
    %s69 = ssub.s32 %s21, %s30
    %p70 = scmp.eq.s32.totalorder %s69, 0
    %s72 = sadd.s32 %s71, 1
    %s73 = scalar_select %p70, %s71, %s72
    %p76 = pneg %p70
    %p77 = scmp.eq.s32.totalorder %s12, 1
    %p78 = por %p76, %p77
    %p79 = scmp.ne.s32.totalorder %s71, %s74
    %p80 = scmp.eq.s32.totalorder %s12, 0
    %p81 = por %p79, %p80
    %p82 = scmp.ne.s32.totalorder %s71, %s74
    %p83 = scmp.eq.s32.totalorder %s17, 1
    %p84 = por %p82, %p83
    %p85 = scmp.ne.s32.totalorder %s74, %s75
    %p86 = scmp.eq.s32.totalorder %s17, 0
    %p87 = por %p85, %p86
    %p88 = scmp.ne.s32.totalorder %s74, %s75
    %p89 = scmp.eq.s32.totalorder %s18, 1
    %p90 = por %p88, %p89
    %p92 = scmp.ne.s32.totalorder %s75, %s91
    %p93 = scmp.eq.s32.totalorder %s18, 0
    %p94 = por %p92, %p93
    %s96 = sadd.s32 %s95, 1
    %p99 = scmp.eq.s32.totalorder %s12, 1
    %p100 = scmp.ne.s32.totalorder %s95, %s97
    %p101 = scmp.eq.s32.totalorder %s12, 0
    %p102 = por %p100, %p101
    %p103 = scmp.ne.s32.totalorder %s95, %s97
    %p104 = scmp.eq.s32.totalorder %s17, 1
    %p105 = por %p103, %p104
    %p106 = scmp.ne.s32.totalorder %s97, %s98
    %p107 = scmp.eq.s32.totalorder %s17, 0
    %p108 = por %p106, %p107
    %p109 = scmp.ne.s32.totalorder %s97, %s98
    %p110 = scmp.eq.s32.totalorder %s18, 1
    %p111 = por %p109, %p110
    %p113 = scmp.ne.s32.totalorder %s98, %s112
    %p114 = scmp.eq.s32.totalorder %s18, 0
    %p115 = por %p113, %p114
    %s116 = ssub.s32 %s19, %s38
    %s117 = ssub.s32 %s20, %s34
    %s118 = sor.u32 %s116, %s117
    %p119 = scmp.eq.s32.totalorder %s118, 0
    %s121 = sadd.s32 %s120, 1
    %s122 = scalar_select %p119, %s120, %s121
    %p125 = pneg %p119
    %p126 = scmp.eq.s32.totalorder %s12, 1
    %p127 = por %p125, %p126
    %p128 = scmp.ne.s32.totalorder %s120, %s123
    %p129 = scmp.eq.s32.totalorder %s12, 0
    %p130 = por %p128, %p129
    %p131 = scmp.ne.s32.totalorder %s120, %s123
    %p132 = scmp.eq.s32.totalorder %s17, 1
    %p133 = por %p131, %p132
    %p134 = scmp.ne.s32.totalorder %s123, %s124
    %p135 = scmp.eq.s32.totalorder %s17, 0
    %p136 = por %p134, %p135
    %p137 = scmp.ne.s32.totalorder %s123, %s124
    %p138 = scmp.eq.s32.totalorder %s18, 1
    %p139 = por %p137, %p138
    %p141 = scmp.ne.s32.totalorder %s124, %s140
    %p142 = scmp.eq.s32.totalorder %s18, 0
    %p143 = por %p141, %p142
    %s144 = ssub.s32 %s19, %s38
    %s145 = ssub.s32 %s20, %s34
    %s146 = sor.u32 %s144, %s145
    %p147 = scmp.eq.s32.totalorder %s146, 0
    %s149 = sadd.s32 %s148, 1
    %s150 = scalar_select %p147, %s148, %s149
    %p153 = pneg %p147
    %p154 = scmp.eq.s32.totalorder %s12, 1
    %p155 = por %p153, %p154
    %p156 = scmp.ne.s32.totalorder %s148, %s151
    %p157 = scmp.eq.s32.totalorder %s12, 0
    %p158 = por %p156, %p157
    %p159 = scmp.ne.s32.totalorder %s148, %s151
    %p160 = scmp.eq.s32.totalorder %s17, 1
    %p161 = por %p159, %p160
    %p162 = scmp.ne.s32.totalorder %s151, %s152
    %p163 = scmp.eq.s32.totalorder %s17, 0
    %p164 = por %p162, %p163
    %p165 = scmp.ne.s32.totalorder %s151, %s152
    %p166 = scmp.eq.s32.totalorder %s18, 1
    %p167 = por %p165, %p166
    %p169 = scmp.ne.s32.totalorder %s152, %s168
    %p170 = scmp.eq.s32.totalorder %s18, 0
    %p171 = por %p169, %p170
    %s172 = ssub.s32 %s19, %s38
    %s173 = ssub.s32 %s20, %s34
    %s174 = sor.u32 %s172, %s173
    %p175 = scmp.eq.s32.totalorder %s174, 0
    %s177 = sadd.s32 %s176, 1
    %s178 = scalar_select %p175, %s176, %s177
    %p181 = pneg %p175
    %p182 = scmp.eq.s32.totalorder %s12, 1
    %p183 = por %p181, %p182
    %p184 = scmp.ne.s32.totalorder %s176, %s179
    %p185 = scmp.eq.s32.totalorder %s12, 0
    %p186 = por %p184, %p185
    %p187 = scmp.ne.s32.totalorder %s176, %s179
    %p188 = scmp.eq.s32.totalorder %s17, 1
    %p189 = por %p187, %p188
    %p190 = scmp.ne.s32.totalorder %s179, %s180
    %p191 = scmp.eq.s32.totalorder %s17, 0
    %p192 = por %p190, %p191
    %p193 = scmp.ne.s32.totalorder %s179, %s180
    %p194 = scmp.eq.s32.totalorder %s18, 1
    %p195 = por %p193, %p194
    %p197 = scmp.ne.s32.totalorder %s180, %s196
    %p198 = scmp.eq.s32.totalorder %s18, 0
    %p199 = por %p197, %p198
    %p200 = scmp.le.s32.totalorder 1, %s12
    %p201 = scmp.lt.s32.totalorder %s12, 3
    %p202 = pnand %p200, %p201
    %p203 = pneg %p202
    // Predicated region
    $region9: #{gqa_forward.3} parent=5 // pred_check
      _
    $region10: #{gqa_forward.3} parent=5 // pred_check_branch
      %205 = sbr.rel (%p202) target = $region12
    $region11: #{gqa_forward.3} parent=5 // pred_region
      %s206 = ssub.s32 %s12, 1
      // Predicated region
      $region13: #{gqa_forward.3} parent=11 // pred_check
        %p207 = pneg %p87
      $region14: #{gqa_forward.3} parent=11 // pred_check_branch
        %209 = sbr.rel (%p207) target = $region16
      $region15: #{gqa_forward.3} parent=11 // pred_region
        %s210 = smul.u32 16, %s24
        %p211 = scmp.lt.s32.totalorder %s210, 15
        %s212 = scalar_select %p211, %s210, 15
        %s213 = smul.addr %s212, 4
        %s214 = scalar_lea.vmem %s1, %s213
        %s215 = smul.u32 16, %s24
      $region16: #{gqa_forward.3} parent=11 // pred_fallthru
        _
      // Predicated region
      $region17: #{gqa_forward.3} parent=11 // pred_check
        %p216 = pneg %p108
      $region18: #{gqa_forward.3} parent=11 // pred_check_branch
        %218 = sbr.rel (%p216) target = $region20
      $region19: #{gqa_forward.3} parent=11 // pred_region
        _
      $region20: #{gqa_forward.3} parent=11 // pred_fallthru
        _
    $region12: #{gqa_forward.3} parent=5 // pred_fallthru
      _
    %p219 = scmp.lt.s32.totalorder %s12, 2
    // Predicated region
    $region21: #{gqa_forward.3} parent=5 // pred_check
      %p220 = pneg %p219
    $region22: #{gqa_forward.3} parent=5 // pred_check_branch
      %222 = sbr.rel (%p220) target = $region24
    $region23: #{gqa_forward.3} parent=5 // pred_region
      // Predicated region
      $region25: #{gqa_forward.3} parent=23 // pred_check
        %p223 = pneg %p55
      $region26: #{gqa_forward.3} parent=23 // pred_check_branch
        %225 = sbr.rel (%p223) target = $region28
      $region27: #{gqa_forward.3} parent=23 // pred_region
        %s226 = smul.u32 2, %s20
        %p227 = scmp.lt.s32.totalorder %s19, 1
        %s228 = scalar_select %p227, %s19, 1
        %p229 = scmp.lt.s32.totalorder %s226, 1
        %s230 = scalar_select %p229, %s226, 1
        %p231 = scmp.lt.s32.totalorder %s21, 0
        %s232 = scalar_select %p231, %s21, 0
        %s233 = sadd.s32 %s232, %s230
        %s234 = smul.addr %s228, 2
        %s235 = sadd.s32 %s233, %s234
        %s236 = smul.addr %s235, 4
        %s237 = scalar_lea.vmem %s0, %s236
        %s238 = smul.u32 2, %s20
      $region28: #{gqa_forward.3} parent=23 // pred_fallthru
        _
    $region24: #{gqa_forward.3} parent=5 // pred_fallthru
      _
    %p239 = scmp.le.s32.totalorder 1, %s12
    %p240 = scmp.lt.s32.totalorder %s12, 3
    %p241 = pnand %p239, %p240
    %p242 = pneg %p241
    // Predicated region
    $region29: #{gqa_forward.3} parent=5 // pred_check
      _
    $region30: #{gqa_forward.3} parent=5 // pred_check_branch
      %244 = sbr.rel (%p241) target = $region32
    $region31: #{gqa_forward.3} parent=5 // pred_region
      %s245 = ssub.s32 %s12, 1
      %s246 = smul.u32 2, %s23
      %p247 = scmp.lt.s32.totalorder %s22, 1
      %s248 = scalar_select %p247, %s22, 1
      %p249 = scmp.lt.s32.totalorder %s246, 1
      %s250 = scalar_select %p249, %s246, 1
      %p251 = scmp.lt.s32.totalorder %s24, 0
      %s252 = scalar_select %p251, %s24, 0
      %s253 = sadd.s32 %s252, %s250
      %s254 = smul.addr %s248, 2
      %s255 = sadd.s32 %s253, %s254
      %s256 = smul.addr %s255, 4
      %s257 = scalar_lea.vmem %s0, %s256
      %p258 = pneg %p61
      %p259 = pneg %p58
      %s260 = smul.u32 16, %s24
      %p261 = scmp.lt.s32.totalorder %s260, 15
      %s262 = scalar_select %p261, %s260, 15
      %s263 = smul.addr %s262, 4
      %s264 = scalar_lea.vmem %s1, %s263
      %p265 = pneg %p87
      %p266 = pneg %p84
      %p267 = pneg %p108
      %p268 = pneg %p105
      %p269 = pneg %p136
      %p270 = pneg %p133
      %s271 = smul.u32 2, %s23
      %p272 = scmp.lt.s32.totalorder %s22, 1
      %s273 = scalar_select %p272, %s22, 1
      %p274 = scmp.lt.s32.totalorder %s271, 1
      %s275 = scalar_select %p274, %s271, 1
      %s276 = smul.addr %s273, 8
      %s277 = sadd.s32 %s275, %s276
      %s278 = smul.addr %s277, 4
      %s279 = scalar_lea.vmem %s3, %s278
      %p280 = pneg %p164
      %p281 = pneg %p161
      %s282 = smul.u32 2, %s23
      %p283 = scmp.lt.s32.totalorder %s22, 1
      %s284 = scalar_select %p283, %s22, 1
      %p285 = scmp.lt.s32.totalorder %s282, 1
      %s286 = scalar_select %p285, %s282, 1
      %s287 = smul.addr %s284, 4
      %s288 = sadd.s32 %s286, %s287
      %s289 = smul.addr %s288, 4
      %s290 = scalar_lea.vmem %s4, %s289
      %p291 = pneg %p192
      %p292 = pneg %p189
      %s293 = smul.u32 2, %s23
      %p294 = scmp.lt.s32.totalorder %s22, 1
      %s295 = scalar_select %p294, %s22, 1
      %p296 = scmp.lt.s32.totalorder %s293, 1
      %s297 = scalar_select %p296, %s293, 1
      %s298 = smul.addr %s295, 4
      %s299 = sadd.s32 %s297, %s298
      %s300 = smul.addr %s299, 4
      %s301 = scalar_lea.vmem %s5, %s300
      %s302 = smul.u32 2, %s23
      %p303 = scmp.lt.s32.totalorder %s22, 1
      %s304 = scalar_select %p303, %s22, 1
      %p305 = scmp.lt.s32.totalorder %s302, 1
      %s306 = scalar_select %p305, %s302, 1
      %p307 = scmp.lt.s32.totalorder %s24, 0
      %s308 = scalar_select %p307, %s24, 0
      %s309 = sadd.s32 %s308, %s306
      %s310 = smul.addr %s304, 2
      %s311 = sadd.s32 %s309, %s310
      %s312 = smul.addr %s311, 4
      %s313 = scalar_lea.vmem %s0, %s312
      %s314 = smul.u32 2, %s23
      %s315 = smul.u32 16, %s24
      %p316 = scmp.lt.s32.totalorder %s315, 15
      %s317 = scalar_select %p316, %s315, 15
      %s318 = smul.addr %s317, 4
      %s319 = scalar_lea.vmem %s1, %s318
      %s320 = smul.u32 16, %s24
      %s321 = smul.u32 2, %s23
      %p322 = scmp.lt.s32.totalorder %s22, 1
      %s323 = scalar_select %p322, %s22, 1
      %p324 = scmp.lt.s32.totalorder %s321, 1
      %s325 = scalar_select %p324, %s321, 1
      %s326 = smul.addr %s323, 8
      %s327 = sadd.s32 %s325, %s326
      %s328 = smul.addr %s327, 4
      %s329 = scalar_lea.vmem %s3, %s328
      %s330 = smul.u32 2, %s23
      %s331 = smul.u32 2, %s23
      %p332 = scmp.lt.s32.totalorder %s22, 1
      %s333 = scalar_select %p332, %s22, 1
      %p334 = scmp.lt.s32.totalorder %s331, 1
      %s335 = scalar_select %p334, %s331, 1
      %s336 = smul.addr %s333, 4
      %s337 = sadd.s32 %s335, %s336
      %s338 = smul.addr %s337, 4
      %s339 = scalar_lea.vmem %s4, %s338
      %s340 = smul.u32 2, %s23
      %s341 = smul.u32 2, %s23
      %p342 = scmp.lt.s32.totalorder %s22, 1
      %s343 = scalar_select %p342, %s22, 1
      %p344 = scmp.lt.s32.totalorder %s341, 1
      %s345 = scalar_select %p344, %s341, 1
      %s346 = smul.addr %s343, 4
      %s347 = sadd.s32 %s345, %s346
      %s348 = smul.addr %s347, 4
      %s349 = scalar_lea.vmem %s5, %s348
      %s350 = smul.u32 2, %s23
      %p352 = scmp.eq.s32.totalorder %s24, 0
      // Predicated region
      $region33: #{gqa_forward.3} parent=31 // pred_check
        %p353 = pneg %p352
      $region34: #{gqa_forward.3} parent=31 // pred_check_branch
        %355 = sbr.rel (%p353) target = $region36
      $region35: #{gqa_forward.3} parent=31 // pred_region
        %vm356 = vcmask 523264
        %357 = vst.msk [vmem:[#allocation2] sm:$0xff] %vm356, 0.0
        %358 = vst.msk [vmem:[#allocation2 + $0x8] sm:$0xff] %vm356, 0.0
      $region36: #{gqa_forward.3} parent=31 // pred_fallthru
        _
      %v359 = vld [vmem:[#allocation2] sm:$0xff]
      %v360 = vld [vmem:[#allocation2 + $0x8] sm:$0xff]
      %v361 = vld [vmem:[%s313] sm:$0xf]
      %v362 = vld [vmem:[%s313 + $0x4] sm:$0xf]
      %v363 = vld [vmem:[%s319] sm:$0xf]
      %v364 = vld [vmem:[%s319 + $0x4] sm:$0xf]
      %v365 = vld [vmem:[%s319 + $0x8] sm:$0xf]
      %v366 = vld [vmem:[%s319 + $0xc] sm:$0xf]
      %v367 = vld [vmem:[%s319 + $0x10] sm:$0xf]
      %v368 = vld [vmem:[%s319 + $0x14] sm:$0xf]
      %v369 = vld [vmem:[%s319 + $0x18] sm:$0xf]
      %v370 = vld [vmem:[%s319 + $0x1c] sm:$0xf]
      %v371 = vld [vmem:[%s319 + $0x20] sm:$0xf]
      %v372 = vld [vmem:[%s319 + $0x24] sm:$0xf]
      %v373 = vld [vmem:[%s319 + $0x28] sm:$0xf]
      %v374 = vld [vmem:[%s319 + $0x2c] sm:$0xf]
      %v375 = vld [vmem:[%s319 + $0x30] sm:$0xf]
      %v376 = vld [vmem:[%s319 + $0x34] sm:$0xf]
      %v377 = vld [vmem:[%s319 + $0x38] sm:$0xf]
      %v378 = vld [vmem:[%s319 + $0x3c] sm:$0xf]
      %v381 = vunpack.c.l.b16 %v361
      %v382 = vunpack.c.l.b16 %v362
      %v383 = vpack.c.b16 %v382, %v381
      %v401 = vunpack.c.l.b16 %v363
      %v402 = vunpack.c.l.b16 %v364
      %v403 = vunpack.c.l.b16 %v365
      %v404 = vunpack.c.l.b16 %v366
      %v405 = vunpack.c.l.b16 %v367
      %v406 = vunpack.c.l.b16 %v368
      %v407 = vunpack.c.l.b16 %v369
      %v408 = vunpack.c.l.b16 %v370
      %v409 = vunpack.c.l.b16 %v371
      %v410 = vunpack.c.l.b16 %v372
      %v411 = vunpack.c.l.b16 %v373
      %v412 = vunpack.c.l.b16 %v374
      %v413 = vunpack.c.l.b16 %v375
      %v414 = vunpack.c.l.b16 %v376
      %v415 = vunpack.c.l.b16 %v377
      %v416 = vunpack.c.l.b16 %v378
      %v417 = vpack.c.b16 %v402, %v401
      %v418 = vpack.c.b16 %v404, %v403
      %v419 = vpack.c.b16 %v406, %v405
      %v420 = vpack.c.b16 %v408, %v407
      %v421 = vpack.c.b16 %v410, %v409
      %v422 = vpack.c.b16 %v412, %v411
      %v423 = vpack.c.b16 %v414, %v413
      %v424 = vpack.c.b16 %v416, %v415
      %433 = vmatprep.subr.bf16.mxu0 0
      %434 = vmatpush1.bf16.msra.mxu0 %v417
      %435 = vmatprep.subr.bf16.mxu0 0
      %436 = vmatpush1.bf16.msra.mxu0 %v418
      %437 = vmatprep.subr.bf16.mxu0 0
      %438 = vmatpush1.bf16.msra.mxu0 %v419
      %439 = vmatprep.subr.bf16.mxu0 0
      %440 = vmatpush1.bf16.msra.mxu0 %v420
      %441 = vmatprep.subr.bf16.mxu0 0
      %442 = vmatpush1.bf16.msra.mxu0 %v421
      %443 = vmatprep.subr.bf16.mxu0 0
      %444 = vmatpush1.bf16.msra.mxu0 %v422
      %445 = vmatprep.subr.bf16.mxu0 0
      %446 = vmatpush1.bf16.msra.mxu0 %v423
      %447 = vmatprep.subr.bf16.mxu0 0
      %448 = vmatpush1.bf16.msra.mxu0 %v424
      %449 = vmatprep.subr.bf16.mxu0 0
      %450 = vmatpush1.bf16.msra.mxu0 0
      %451 = vmatprep.subr.bf16.mxu0 0
      %452 = vmatpush1.bf16.msra.mxu0 0
      %453 = vmatprep.subr.bf16.mxu0 0
      %454 = vmatpush1.bf16.msra.mxu0 0
      %455 = vmatprep.subr.bf16.mxu0 0
      %456 = vmatpush1.bf16.msra.mxu0 0
      %457 = vmatprep.subr.bf16.mxu0 0
      %458 = vmatpush1.bf16.msra.mxu0 0
      %459 = vmatprep.subr.bf16.mxu0 0
      %460 = vmatpush1.bf16.msra.mxu0 0
      %461 = vmatprep.subr.bf16.mxu0 0
      %462 = vmatpush1.bf16.msra.mxu0 0
      %463 = vmatprep.subr.bf16.mxu0 0
      %464 = vmatpush1.bf16.msra.mxu0 0
      %465 = vmatprep.mubr.bf16.mxu0 0
      %466 = vmatmul.mubr.bf16.gmra.mrb[0].mxu0 %v383
      %v467 = vpop.f32.mrb[0].mxu0
      %v468 = vadd.f32 0.0, %v467
      %v469 = vpop.f32.mrb[0].mxu0
      %v470 = vpop.f32.mrb[0].mxu0
      %v471 = vadd.f32 0.0, %v470
      %v472 = vpop.f32.mrb[0].mxu0
      %473 = vdwg.mxu0
      %v474 = vadd.f32 %v359, %v468
      %v475 = vadd.f32 %v360, %v471
      %vm476 = vcmask 523264
      %477 = vst.msk [vmem:[#allocation2] sm:$0xff] %vm476, %v474
      %478 = vst.msk [vmem:[#allocation2 + $0x8] sm:$0xff] %vm476, %v475
      // Predicated region
      $region37: #{gqa_forward.3} parent=31 // pred_check
        %p479 = pneg %p352
      $region38: #{gqa_forward.3} parent=31 // pred_check_branch
        %481 = sbr.rel (%p479) target = $region40
      $region39: #{gqa_forward.3} parent=31 // pred_region
        %v482 = vld [vmem:[#allocation2] sm:$0xff]
        %v483 = vld [vmem:[#allocation2 + $0x8] sm:$0xff]
        %v484 = vld [vmem:[%s2] sm:$0x1]
        %v486 = vlaneseq
        %v487 = vshrl.u32 %v486, 7
        %v488 = vsub.s32 0, %v487
        %v489 = vrot.slane %v484, %v488
        %v491 = vadd.f32 %v482, %v489
        %v492 = vadd.f32 %v483, %v489
        %v493 = vpack.c.bf16 %v492, %v491
        %v495 = vunpack.c.l.b16 %v493
        %v496 = vunpack.c.h.b16 %v493
        %v497 = vpack.c.b16 %v495, %v495
        %v498 = vpack.c.b16 %v496, %v496
        %vm501 = vcmask 60416
        %502 = vst.msk [vmem:[%s329] sm:$0xf] %vm501, %v497
        %503 = vst.msk [vmem:[%s329 + $0x4] sm:$0xf] %vm501, %v498
        %504 = vrot.lane.b32.xlu0 %v497, 120
        %v505 = vpop.permute.xlu0 %504
        %506 = vrot.lane.b32.xlu0 %v498, 120
        %v507 = vpop.permute.xlu0 %506
        %s510 = scalar_lea.vmem %s329, 8
        %511 = vst.msk [vmem:[%s510] sm:$0xf] %vm501, %v505
        %512 = vst.msk [vmem:[%s510 + $0x4] sm:$0xf] %vm501, %v507
        %513 = vrot.lane.b32.xlu0 %v497, 112
        %v514 = vpop.permute.xlu0 %513
        %515 = vrot.lane.b32.xlu0 %v498, 112
        %v516 = vpop.permute.xlu0 %515
        %s519 = scalar_lea.vmem %s329, 16
        %520 = vst.msk [vmem:[%s519] sm:$0xf] %vm501, %v514
        %521 = vst.msk [vmem:[%s519 + $0x4] sm:$0xf] %vm501, %v516
        %522 = vrot.lane.b32.xlu0 %v497, 104
        %v523 = vpop.permute.xlu0 %522
        %524 = vrot.lane.b32.xlu0 %v498, 104
        %v525 = vpop.permute.xlu0 %524
        %s528 = scalar_lea.vmem %s329, 24
        %529 = vst.msk [vmem:[%s528] sm:$0xf] %vm501, %v523
        %530 = vst.msk [vmem:[%s528 + $0x4] sm:$0xf] %vm501, %v525
        %531 = vrot.lane.b32.xlu0 %v497, 96
        %v532 = vpop.permute.xlu0 %531
        %533 = vrot.lane.b32.xlu0 %v498, 96
        %v534 = vpop.permute.xlu0 %533
        %537 = vst.msk [vmem:[%s339] sm:$0xf] %vm501, %v532
        %538 = vst.msk [vmem:[%s339 + $0x4] sm:$0xf] %vm501, %v534
        %539 = vrot.lane.b32.xlu0 %v497, 80
        %v540 = vpop.permute.xlu0 %539
        %541 = vrot.lane.b32.xlu0 %v498, 80
        %v542 = vpop.permute.xlu0 %541
        %545 = vst.msk [vmem:[%s349] sm:$0xf] %vm501, %v540
        %546 = vst.msk [vmem:[%s349 + $0x4] sm:$0xf] %vm501, %v542
        %547 = vrot.lane.b32.xlu0 %v497, 88
        %v548 = vpop.permute.xlu0 %547
        %549 = vrot.lane.b32.xlu0 %v498, 88
        %v550 = vpop.permute.xlu0 %549
        %s553 = scalar_lea.vmem %s339, 8
        %554 = vst.msk [vmem:[%s553] sm:$0xf] %vm501, %v548
        %555 = vst.msk [vmem:[%s553 + $0x4] sm:$0xf] %vm501, %v550
        %556 = vrot.lane.b32.xlu0 %v497, 72
        %v557 = vpop.permute.xlu0 %556
        %558 = vrot.lane.b32.xlu0 %v498, 72
        %v559 = vpop.permute.xlu0 %558
        %s562 = scalar_lea.vmem %s349, 8
        %563 = vst.msk [vmem:[%s562] sm:$0xf] %vm501, %v557
        %564 = vst.msk [vmem:[%s562 + $0x4] sm:$0xf] %vm501, %v559
      $region40: #{gqa_forward.3} parent=31 // pred_fallthru
        _
      %s565 = smul.u32 2, %s23
      %p566 = scmp.lt.s32.totalorder %s22, 1
      %s567 = scalar_select %p566, %s22, 1
      %p568 = scmp.lt.s32.totalorder %s565, 1
      %s569 = scalar_select %p568, %s565, 1
      %s570 = smul.addr %s567, 8
      %s571 = sadd.s32 %s569, %s570
      %s572 = smul.addr %s571, 4
      %s573 = scalar_lea.vmem %s3, %s572
      %s574 = smul.u32 2, %s23
      %p575 = scmp.lt.s32.totalorder %s22, 1
      %s576 = scalar_select %p575, %s22, 1
      %p577 = scmp.lt.s32.totalorder %s574, 1
      %s578 = scalar_select %p577, %s574, 1
      %s579 = smul.addr %s576, 4
      %s580 = sadd.s32 %s578, %s579
      %s581 = smul.addr %s580, 4
      %s582 = scalar_lea.vmem %s4, %s581
      %s583 = smul.u32 2, %s23
      %p584 = scmp.lt.s32.totalorder %s22, 1
      %s585 = scalar_select %p584, %s22, 1
      %p586 = scmp.lt.s32.totalorder %s583, 1
      %s587 = scalar_select %p586, %s583, 1
      %s588 = smul.addr %s585, 4
      %s589 = sadd.s32 %s587, %s588
      %s590 = smul.addr %s589, 4
      %s591 = scalar_lea.vmem %s5, %s590
      // Predicated region
      $region41: #{gqa_forward.3} parent=31 // pred_check
        %p592 = pneg %p133
      $region42: #{gqa_forward.3} parent=31 // pred_check_branch
        %594 = sbr.rel (%p592) target = $region44
      $region43: #{gqa_forward.3} parent=31 // pred_region
        %s595 = smul.u32 2, %s23
      $region44: #{gqa_forward.3} parent=31 // pred_fallthru
        _
      // Predicated region
      $region45: #{gqa_forward.3} parent=31 // pred_check
        %p596 = pneg %p161
      $region46: #{gqa_forward.3} parent=31 // pred_check_branch
        %598 = sbr.rel (%p596) target = $region48
      $region47: #{gqa_forward.3} parent=31 // pred_region
        %s599 = smul.u32 2, %s23
      $region48: #{gqa_forward.3} parent=31 // pred_fallthru
        _
      // Predicated region
      $region49: #{gqa_forward.3} parent=31 // pred_check
        %p600 = pneg %p189
      $region50: #{gqa_forward.3} parent=31 // pred_check_branch
        %602 = sbr.rel (%p600) target = $region52
      $region51: #{gqa_forward.3} parent=31 // pred_region
        %s603 = smul.u32 2, %s23
      $region52: #{gqa_forward.3} parent=31 // pred_fallthru
        _
    $region32: #{gqa_forward.3} parent=5 // pred_fallthru
      _
    %p604 = scmp.le.s32.totalorder 2, %s12
    // Predicated region
    $region53: #{gqa_forward.3} parent=5 // pred_check
      %p605 = pneg %p604
    $region54: #{gqa_forward.3} parent=5 // pred_check_branch
      %607 = sbr.rel (%p605) target = $region56
    $region55: #{gqa_forward.3} parent=5 // pred_region
      %s608 = ssub.s32 %s12, 2
      // Predicated region
      $region57: #{gqa_forward.3} parent=55 // pred_check
        %p609 = pneg %p139
      $region58: #{gqa_forward.3} parent=55 // pred_check_branch
        %611 = sbr.rel (%p609) target = $region60
      $region59: #{gqa_forward.3} parent=55 // pred_region
        %s612 = smul.u32 2, %s26
        %p613 = scmp.lt.s32.totalorder %s25, 1
        %s614 = scalar_select %p613, %s25, 1
        %p615 = scmp.lt.s32.totalorder %s612, 1
        %s616 = scalar_select %p615, %s612, 1
        %s617 = smul.addr %s614, 8
        %s618 = sadd.s32 %s616, %s617
        %s619 = smul.addr %s618, 4
        %s620 = scalar_lea.vmem %s3, %s619
      $region60: #{gqa_forward.3} parent=55 // pred_fallthru
        _
      // Predicated region
      $region61: #{gqa_forward.3} parent=55 // pred_check
        %p621 = pneg %p167
      $region62: #{gqa_forward.3} parent=55 // pred_check_branch
        %623 = sbr.rel (%p621) target = $region64
      $region63: #{gqa_forward.3} parent=55 // pred_region
        %s624 = smul.u32 2, %s26
        %p625 = scmp.lt.s32.totalorder %s25, 1
        %s626 = scalar_select %p625, %s25, 1
        %p627 = scmp.lt.s32.totalorder %s624, 1
        %s628 = scalar_select %p627, %s624, 1
        %s629 = smul.addr %s626, 4
        %s630 = sadd.s32 %s628, %s629
        %s631 = smul.addr %s630, 4
        %s632 = scalar_lea.vmem %s4, %s631
      $region64: #{gqa_forward.3} parent=55 // pred_fallthru
        _
      // Predicated region
      $region65: #{gqa_forward.3} parent=55 // pred_check
        %p633 = pneg %p195
      $region66: #{gqa_forward.3} parent=55 // pred_check_branch
        %635 = sbr.rel (%p633) target = $region68
      $region67: #{gqa_forward.3} parent=55 // pred_region
        %s636 = smul.u32 2, %s26
        %p637 = scmp.lt.s32.totalorder %s25, 1
        %s638 = scalar_select %p637, %s25, 1
        %p639 = scmp.lt.s32.totalorder %s636, 1
        %s640 = scalar_select %p639, %s636, 1
        %s641 = smul.addr %s638, 4
        %s642 = sadd.s32 %s640, %s641
        %s643 = smul.addr %s642, 4
        %s644 = scalar_lea.vmem %s5, %s643
      $region68: #{gqa_forward.3} parent=55 // pred_fallthru
        _
    $region56: #{gqa_forward.3} parent=5 // pred_fallthru
      _
  $region6: #{gqa_forward.3} parent=0 // loop_footer
    %s16 = sadd.s32 1, %s12
  $region7: #{gqa_forward.3} parent=0 // loop_footer_branch
    %11 = sbr.rel target = $region3
  $region8: #{gqa_forward.3} parent=0 // loop_exit
    _

// kernel: gqa_forward.4
$region0: #{gqa_forward.4}
  #allocation0 [shape = 'u32[]', space=smem, size = 0x4, offset = 0x4, fixed_abs, tag = 'smem constant byte address 0x4 - core index']
  #allocation1 [shape = 'u32[144,128]{1,0:T(1,128)}', space=vmem, size = 0x12000, scoped, tag = 'internal scratch']
  #allocation2 [shape = 'f32[64,1]{1,0:T(8,128)}', space=vmem, size = 0x8000, scoped, tag = 'scratch operand']
  #allocation3 [shape = 'f32[64,1]{1,0:T(8,128)}', space=vmem, size = 0x8000, scoped, tag = 'scratch operand']
  #allocation4 [shape = 'f32[64,8]{1,0:T(8,128)}', space=vmem, size = 0x8000, scoped, tag = 'scratch operand']
  #allocation5 [shape = 's32[1]{0}', space=sflag, size = 0x4, scoped, tag = 'scoped memory for gqa_forward.4']
  #allocation6 [shape = 's32[1]{0:T(128)S(6)}', space=smem, size = 0x200, scoped, tag = 'prefetched SMEM operand 0']
  #allocation7 [shape = 's32[1]{0:T(128)S(6)}', space=smem, size = 0x200, scoped, tag = 'prefetched SMEM operand 1']
  %s0 = inlined_call_operand.<no memory space> [shape: s32[1], index: 0, kind: input, shape index: {}, may-alias: {0,1}]
  %s1 = inlined_call_operand.<no memory space> [shape: s32[1], index: 1, kind: input, shape index: {}, may-alias: {0,1}]
  %s2 = inlined_call_operand.vmem [shape: bf16[2,4,16,8], index: 2, kind: input, shape index: {}]
  %s3 = inlined_call_operand.vmem [shape: bf16[2,2,16,8], index: 3, kind: input, shape index: {}]
  %s4 = inlined_call_operand.vmem [shape: bf16[2,2,16,8], index: 4, kind: input, shape index: {}]
  %s5 = inlined_call_operand.vmem [shape: bf16[2,16,32], index: 5, kind: output, shape index: {}]
  %s6 = sld [smem:[#allocation0]]
  $region53: #{gqa_forward.4} parent=0
    _
  %s8 = ssub.s32 1, %s6
  %s9 = scalar_select 0, %s8, %s6
  %10 = sst [smem:[#allocation6]] %s0
  %11 = sst [smem:[#allocation7]] %s1
  loop: start=0, step=1, limit=4
  $region2: #{gqa_forward.4} parent=0 // loop_pre_header
    _
  $region3: #{gqa_forward.4} parent=0 // loop_header
    %s13 = sphi 0, %s17
    %p14 = scmp.ge.s32.totalorder %s13, 4
    %s20 = sphi 0, %s32
    %s21 = sphi 0, %s28
    %s22 = sphi 0, %s20
    %s23 = sphi 0, %s21
    %s24 = sphi 0, %s22
    %s25 = sphi 0, %s23
    %s39 = sphi 0, %s41
    %s42 = sphi 0, %s39
    %s43 = sphi 0, %s42
    %s59 = sphi 0, %s43
    %s69 = sphi 0, %s71
    %s72 = sphi 0, %s69
    %s73 = sphi 0, %s72
    %s89 = sphi 0, %s73
    %s99 = sphi 0, %s101
    %s102 = sphi 0, %s99
    %s103 = sphi 0, %s102
    %s119 = sphi 0, %s103
    %s129 = sphi 0, %s131
    %s132 = sphi 0, %s129
    %s133 = sphi 0, %s132
    %s149 = sphi 0, %s133
  $region4: #{gqa_forward.4} parent=0 // loop_header_branch
    %16 = sbr.rel (%p14) target = $region8
  $region5: #{gqa_forward.4} parent=0 // loop_body
    %s18 = ssub.s32 %s13, 1
    %s19 = ssub.s32 %s13, 2
    %s26 = sadd.s32 1, %s21
    %p27 = scmp.ge.s32.totalorder %s26, 1
    %s28 = scalar_select %p27, 0, %s26
    %s29 = sadd.s32 1, %s20
    %s30 = scalar_select %p27, %s29, %s20
    %p31 = scmp.ge.s32.totalorder %s30, 2
    %s32 = scalar_select %p31, 0, %s30
    %s33 = sld [smem:[#allocation6 + %s21]]
    %s34 = sld [smem:[#allocation6 + %s28]]
    %s35 = ssub.s32 %s20, %s32
    %s36 = ssub.s32 %s33, %s34
    %s37 = sor.u32 %s35, %s36
    %p38 = scmp.eq.s32.totalorder %s37, 0
    %s40 = sadd.s32 %s39, 1
    %s41 = scalar_select %p38, %s39, %s40
    %p44 = pneg %p38
    %p45 = scmp.eq.s32.totalorder %s13, 1
    %p46 = por %p44, %p45
    %p47 = scmp.ne.s32.totalorder %s39, %s42
    %p48 = scmp.eq.s32.totalorder %s13, 0
    %p49 = por %p47, %p48
    %p50 = scmp.ne.s32.totalorder %s39, %s42
    %p51 = scmp.eq.s32.totalorder %s18, 1
    %p52 = por %p50, %p51
    %p53 = scmp.ne.s32.totalorder %s42, %s43
    %p54 = scmp.eq.s32.totalorder %s18, 0
    %p55 = por %p53, %p54
    %p56 = scmp.ne.s32.totalorder %s42, %s43
    %p57 = scmp.eq.s32.totalorder %s19, 1
    %p58 = por %p56, %p57
    %p60 = scmp.ne.s32.totalorder %s43, %s59
    %p61 = scmp.eq.s32.totalorder %s19, 0
    %p62 = por %p60, %p61
    %s63 = sld [smem:[#allocation7 + %s21]]
    %s64 = sld [smem:[#allocation7 + %s28]]
    %s65 = ssub.s32 %s20, %s32
    %s66 = ssub.s32 %s63, %s64
    %s67 = sor.u32 %s65, %s66
    %p68 = scmp.eq.s32.totalorder %s67, 0
    %s70 = sadd.s32 %s69, 1
    %s71 = scalar_select %p68, %s69, %s70
    %p74 = pneg %p68
    %p75 = scmp.eq.s32.totalorder %s13, 1
    %p76 = por %p74, %p75
    %p77 = scmp.ne.s32.totalorder %s69, %s72
    %p78 = scmp.eq.s32.totalorder %s13, 0
    %p79 = por %p77, %p78
    %p80 = scmp.ne.s32.totalorder %s69, %s72
    %p81 = scmp.eq.s32.totalorder %s18, 1
    %p82 = por %p80, %p81
    %p83 = scmp.ne.s32.totalorder %s72, %s73
    %p84 = scmp.eq.s32.totalorder %s18, 0
    %p85 = por %p83, %p84
    %p86 = scmp.ne.s32.totalorder %s72, %s73
    %p87 = scmp.eq.s32.totalorder %s19, 1
    %p88 = por %p86, %p87
    %p90 = scmp.ne.s32.totalorder %s73, %s89
    %p91 = scmp.eq.s32.totalorder %s19, 0
    %p92 = por %p90, %p91
    %s93 = sld [smem:[#allocation7 + %s21]]
    %s94 = sld [smem:[#allocation7 + %s28]]
    %s95 = ssub.s32 %s20, %s32
    %s96 = ssub.s32 %s93, %s94
    %s97 = sor.u32 %s95, %s96
    %p98 = scmp.eq.s32.totalorder %s97, 0
    %s100 = sadd.s32 %s99, 1
    %s101 = scalar_select %p98, %s99, %s100
    %p104 = pneg %p98
    %p105 = scmp.eq.s32.totalorder %s13, 1
    %p106 = por %p104, %p105
    %p107 = scmp.ne.s32.totalorder %s99, %s102
    %p108 = scmp.eq.s32.totalorder %s13, 0
    %p109 = por %p107, %p108
    %p110 = scmp.ne.s32.totalorder %s99, %s102
    %p111 = scmp.eq.s32.totalorder %s18, 1
    %p112 = por %p110, %p111
    %p113 = scmp.ne.s32.totalorder %s102, %s103
    %p114 = scmp.eq.s32.totalorder %s18, 0
    %p115 = por %p113, %p114
    %p116 = scmp.ne.s32.totalorder %s102, %s103
    %p117 = scmp.eq.s32.totalorder %s19, 1
    %p118 = por %p116, %p117
    %p120 = scmp.ne.s32.totalorder %s103, %s119
    %p121 = scmp.eq.s32.totalorder %s19, 0
    %p122 = por %p120, %p121
    %s123 = sld [smem:[#allocation6 + %s21]]
    %s124 = sld [smem:[#allocation6 + %s28]]
    %s125 = ssub.s32 %s20, %s32
    %s126 = ssub.s32 %s123, %s124
    %s127 = sor.u32 %s125, %s126
    %p128 = scmp.eq.s32.totalorder %s127, 0
    %s130 = sadd.s32 %s129, 1
    %s131 = scalar_select %p128, %s129, %s130
    %p134 = pneg %p128
    %p135 = scmp.eq.s32.totalorder %s13, 1
    %p136 = por %p134, %p135
    %p137 = scmp.ne.s32.totalorder %s129, %s132
    %p138 = scmp.eq.s32.totalorder %s13, 0
    %p139 = por %p137, %p138
    %p140 = scmp.ne.s32.totalorder %s129, %s132
    %p141 = scmp.eq.s32.totalorder %s18, 1
    %p142 = por %p140, %p141
    %p143 = scmp.ne.s32.totalorder %s132, %s133
    %p144 = scmp.eq.s32.totalorder %s18, 0
    %p145 = por %p143, %p144
    %p146 = scmp.ne.s32.totalorder %s132, %s133
    %p147 = scmp.eq.s32.totalorder %s19, 1
    %p148 = por %p146, %p147
    %p150 = scmp.ne.s32.totalorder %s133, %s149
    %p151 = scmp.eq.s32.totalorder %s19, 0
    %p152 = por %p150, %p151
    %p153 = scmp.le.s32.totalorder 1, %s13
    %p154 = scmp.lt.s32.totalorder %s13, 3
    %p155 = pnand %p153, %p154
    %p156 = pneg %p155
    // Predicated region
    $region9: #{gqa_forward.4} parent=5 // pred_check
      _
    $region10: #{gqa_forward.4} parent=5 // pred_check_branch
      %158 = sbr.rel (%p155) target = $region12
    $region11: #{gqa_forward.4} parent=5 // pred_region
      %s159 = ssub.s32 %s13, 1
    $region12: #{gqa_forward.4} parent=5 // pred_fallthru
      _
    %p160 = scmp.lt.s32.totalorder %s13, 2
    // Predicated region
    $region13: #{gqa_forward.4} parent=5 // pred_check
      %p161 = pneg %p160
    $region14: #{gqa_forward.4} parent=5 // pred_check_branch
      %163 = sbr.rel (%p161) target = $region16
    $region15: #{gqa_forward.4} parent=5 // pred_region
      // Predicated region
      $region17: #{gqa_forward.4} parent=15 // pred_check
        %p164 = pneg %p49
      $region18: #{gqa_forward.4} parent=15 // pred_check_branch
        %166 = sbr.rel (%p164) target = $region20
      $region19: #{gqa_forward.4} parent=15 // pred_region
        %s167 = sld [smem:[#allocation6 + %s21]]
        %s168 = smul.u32 2, %s167
        %p169 = scmp.lt.s32.totalorder %s20, 1
        %s170 = scalar_select %p169, %s20, 1
        %p171 = scmp.lt.s32.totalorder %s168, 1
        %s172 = scalar_select %p171, %s168, 1
        %s173 = smul.addr %s170, 8
        %s174 = sadd.s32 %s172, %s173
        %s175 = smul.addr %s174, 4
        %s176 = scalar_lea.vmem %s2, %s175
        %s177 = sld [smem:[#allocation6 + %s21]]
        %s178 = smul.u32 2, %s177
      $region20: #{gqa_forward.4} parent=15 // pred_fallthru
        _
      // Predicated region
      $region21: #{gqa_forward.4} parent=15 // pred_check
        %p179 = pneg %p79
      $region22: #{gqa_forward.4} parent=15 // pred_check_branch
        %181 = sbr.rel (%p179) target = $region24
      $region23: #{gqa_forward.4} parent=15 // pred_region
        %s182 = sld [smem:[#allocation7 + %s21]]
        %s183 = smul.u32 2, %s182
        %p184 = scmp.lt.s32.totalorder %s20, 1
        %s185 = scalar_select %p184, %s20, 1
        %p186 = scmp.lt.s32.totalorder %s183, 1
        %s187 = scalar_select %p186, %s183, 1
        %s188 = smul.addr %s185, 4
        %s189 = sadd.s32 %s187, %s188
        %s190 = smul.addr %s189, 4
        %s191 = scalar_lea.vmem %s3, %s190
        %s192 = sld [smem:[#allocation7 + %s21]]
        %s193 = smul.u32 2, %s192
      $region24: #{gqa_forward.4} parent=15 // pred_fallthru
        _
      // Predicated region
      $region25: #{gqa_forward.4} parent=15 // pred_check
        %p194 = pneg %p109
      $region26: #{gqa_forward.4} parent=15 // pred_check_branch
        %196 = sbr.rel (%p194) target = $region28
      $region27: #{gqa_forward.4} parent=15 // pred_region
        %s197 = sld [smem:[#allocation7 + %s21]]
        %s198 = smul.u32 2, %s197
        %p199 = scmp.lt.s32.totalorder %s20, 1
        %s200 = scalar_select %p199, %s20, 1
        %p201 = scmp.lt.s32.totalorder %s198, 1
        %s202 = scalar_select %p201, %s198, 1
        %s203 = smul.addr %s200, 4
        %s204 = sadd.s32 %s202, %s203
        %s205 = smul.addr %s204, 4
        %s206 = scalar_lea.vmem %s4, %s205
        %s207 = sld [smem:[#allocation7 + %s21]]
        %s208 = smul.u32 2, %s207
      $region28: #{gqa_forward.4} parent=15 // pred_fallthru
        _
    $region16: #{gqa_forward.4} parent=5 // pred_fallthru
      _
    %p209 = scmp.le.s32.totalorder 1, %s13
    %p210 = scmp.lt.s32.totalorder %s13, 3
    %p211 = pnand %p209, %p210
    %p212 = pneg %p211
    // Predicated region
    $region29: #{gqa_forward.4} parent=5 // pred_check
      _
    $region30: #{gqa_forward.4} parent=5 // pred_check_branch
      %214 = sbr.rel (%p211) target = $region32
    $region31: #{gqa_forward.4} parent=5 // pred_region
      %s215 = ssub.s32 %s13, 1
      %s216 = sld [smem:[#allocation6 + %s23]]
      %s217 = smul.u32 2, %s216
      %p218 = scmp.lt.s32.totalorder %s22, 1
      %s219 = scalar_select %p218, %s22, 1
      %p220 = scmp.lt.s32.totalorder %s217, 1
      %s221 = scalar_select %p220, %s217, 1
      %s222 = smul.addr %s219, 8
      %s223 = sadd.s32 %s221, %s222
      %s224 = smul.addr %s223, 4
      %s225 = scalar_lea.vmem %s2, %s224
      %p226 = pneg %p55
      %p227 = pneg %p52
      %s228 = sld [smem:[#allocation7 + %s23]]
      %s229 = smul.u32 2, %s228
      %p230 = scmp.lt.s32.totalorder %s22, 1
      %s231 = scalar_select %p230, %s22, 1
      %p232 = scmp.lt.s32.totalorder %s229, 1
      %s233 = scalar_select %p232, %s229, 1
      %s234 = smul.addr %s231, 4
      %s235 = sadd.s32 %s233, %s234
      %s236 = smul.addr %s235, 4
      %s237 = scalar_lea.vmem %s3, %s236
      %p238 = pneg %p85
      %p239 = pneg %p82
      %s240 = sld [smem:[#allocation7 + %s23]]
      %s241 = smul.u32 2, %s240
      %p242 = scmp.lt.s32.totalorder %s22, 1
      %s243 = scalar_select %p242, %s22, 1
      %p244 = scmp.lt.s32.totalorder %s241, 1
      %s245 = scalar_select %p244, %s241, 1
      %s246 = smul.addr %s243, 4
      %s247 = sadd.s32 %s245, %s246
      %s248 = smul.addr %s247, 4
      %s249 = scalar_lea.vmem %s4, %s248
      %p250 = pneg %p115
      %p251 = pneg %p112
      %p252 = pneg %p145
      %p253 = pneg %p142
      %s254 = sld [smem:[#allocation6 + %s23]]
      %s255 = smul.u32 2, %s254
      %p256 = scmp.lt.s32.totalorder %s22, 1
      %s257 = scalar_select %p256, %s22, 1
      %p258 = scmp.lt.s32.totalorder %s255, 1
      %s259 = scalar_select %p258, %s255, 1
      %s260 = smul.addr %s257, 2
      %s261 = sadd.s32 %s259, %s260
      %s262 = smul.addr %s261, 4
      %s263 = scalar_lea.vmem %s5, %s262
      %s264 = sld [smem:[#allocation6 + %s23]]
      %s265 = smul.u32 2, %s264
      %p266 = scmp.lt.s32.totalorder %s22, 1
      %s267 = scalar_select %p266, %s22, 1
      %p268 = scmp.lt.s32.totalorder %s265, 1
      %s269 = scalar_select %p268, %s265, 1
      %s270 = smul.addr %s267, 8
      %s271 = sadd.s32 %s269, %s270
      %s272 = smul.addr %s271, 4
      %s273 = scalar_lea.vmem %s2, %s272
      %s274 = sld [smem:[#allocation6 + %s23]]
      %s275 = smul.u32 2, %s274
      %s276 = sld [smem:[#allocation7 + %s23]]
      %s277 = smul.u32 2, %s276
      %p278 = scmp.lt.s32.totalorder %s22, 1
      %s279 = scalar_select %p278, %s22, 1
      %p280 = scmp.lt.s32.totalorder %s277, 1
      %s281 = scalar_select %p280, %s277, 1
      %s282 = smul.addr %s279, 4
      %s283 = sadd.s32 %s281, %s282
      %s284 = smul.addr %s283, 4
      %s285 = scalar_lea.vmem %s3, %s284
      %s286 = sld [smem:[#allocation7 + %s23]]
      %s287 = smul.u32 2, %s286
      %s288 = sld [smem:[#allocation7 + %s23]]
      %s289 = smul.u32 2, %s288
      %p290 = scmp.lt.s32.totalorder %s22, 1
      %s291 = scalar_select %p290, %s22, 1
      %p292 = scmp.lt.s32.totalorder %s289, 1
      %s293 = scalar_select %p292, %s289, 1
      %s294 = smul.addr %s291, 4
      %s295 = sadd.s32 %s293, %s294
      %s296 = smul.addr %s295, 4
      %s297 = scalar_lea.vmem %s4, %s296
      %s298 = sld [smem:[#allocation7 + %s23]]
      %s299 = smul.u32 2, %s298
      %s300 = sld [smem:[#allocation6 + %s23]]
      %s301 = smul.u32 2, %s300
      %p302 = scmp.lt.s32.totalorder %s22, 1
      %s303 = scalar_select %p302, %s22, 1
      %p304 = scmp.lt.s32.totalorder %s301, 1
      %s305 = scalar_select %p304, %s301, 1
      %s306 = smul.addr %s303, 2
      %s307 = sadd.s32 %s305, %s306
      %s308 = smul.addr %s307, 4
      %s309 = scalar_lea.vmem %s5, %s308
      %s310 = sld [smem:[#allocation6 + %s23]]
      %s311 = smul.u32 2, %s310
      %s313 = sld [smem:[#allocation6 + %s23]]
      %s314 = sld [smem:[#allocation7 + %s23]]
      %p315 = scmp.eq.s32.totalorder %s314, 0
      // Predicated region
      $region33: #{gqa_forward.4} parent=31 // pred_check
        %p316 = pneg %p315
      $region34: #{gqa_forward.4} parent=31 // pred_check_branch
        %318 = sbr.rel (%p316) target = $region36
      $region35: #{gqa_forward.4} parent=31 // pred_region
        %vm319 = vcmask 7168
        %320 = vst.msk [vmem:[#allocation2] sm:$0xff] %vm319, -1e+30
        %321 = vst.msk [vmem:[#allocation2 + $0x8] sm:$0xff] %vm319, -1e+30
        %322 = vst.msk [vmem:[#allocation2 + $0x10] sm:$0xff] %vm319, -1e+30
        %323 = vst.msk [vmem:[#allocation2 + $0x18] sm:$0xff] %vm319, -1e+30
        %324 = vst.msk [vmem:[#allocation2 + $0x20] sm:$0xff] %vm319, -1e+30
        %325 = vst.msk [vmem:[#allocation2 + $0x28] sm:$0xff] %vm319, -1e+30
        %326 = vst.msk [vmem:[#allocation2 + $0x30] sm:$0xff] %vm319, -1e+30
        %327 = vst.msk [vmem:[#allocation2 + $0x38] sm:$0xff] %vm319, -1e+30
        %328 = vst.msk [vmem:[#allocation3] sm:$0xff] %vm319, 0.0
        %329 = vst.msk [vmem:[#allocation3 + $0x8] sm:$0xff] %vm319, 0.0
        %330 = vst.msk [vmem:[#allocation3 + $0x10] sm:$0xff] %vm319, 0.0
        %331 = vst.msk [vmem:[#allocation3 + $0x18] sm:$0xff] %vm319, 0.0
        %332 = vst.msk [vmem:[#allocation3 + $0x20] sm:$0xff] %vm319, 0.0
        %333 = vst.msk [vmem:[#allocation3 + $0x28] sm:$0xff] %vm319, 0.0
        %334 = vst.msk [vmem:[#allocation3 + $0x30] sm:$0xff] %vm319, 0.0
        %335 = vst.msk [vmem:[#allocation3 + $0x38] sm:$0xff] %vm319, 0.0
        %vm336 = vcmask 64512
        %337 = vst.msk [vmem:[#allocation4] sm:$0xff] %vm336, 0.0
        %338 = vst.msk [vmem:[#allocation4 + $0x8] sm:$0xff] %vm336, 0.0
        %339 = vst.msk [vmem:[#allocation4 + $0x10] sm:$0xff] %vm336, 0.0
        %340 = vst.msk [vmem:[#allocation4 + $0x18] sm:$0xff] %vm336, 0.0
        %341 = vst.msk [vmem:[#allocation4 + $0x20] sm:$0xff] %vm336, 0.0
        %342 = vst.msk [vmem:[#allocation4 + $0x28] sm:$0xff] %vm336, 0.0
        %343 = vst.msk [vmem:[#allocation4 + $0x30] sm:$0xff] %vm336, 0.0
        %344 = vst.msk [vmem:[#allocation4 + $0x38] sm:$0xff] %vm336, 0.0
      $region36: #{gqa_forward.4} parent=31 // pred_fallthru
        _
      %v345 = vlaneseq
      %v346 = vshrl.u32 %v345, 7
      %v347 = vadd.s32 %v346, 8
      %v348 = vlaneseq
      %v349 = vand.u32 %v348, 127
      %s350 = smul.u32 %s314, 16
      %v351 = vstv %s350
      %v352 = vadd.s32 %v351, %v349
      %s353 = smul.u32 %s313, 16
      %v354 = vstv %s353
      %v355 = vadd.s32 %v354, %v346
      %v356 = vadd.s32 %v354, %v347
      %vm357 = vcmp.le.s32.totalorder %v352, %v355
      %vm358 = vcmp.le.s32.totalorder %v352, %v356
      %v359 = vld [vmem:[%s273] sm:$0xf]
      %v360 = vld [vmem:[%s273 + $0x4] sm:$0xf]
      %v361 = vld [vmem:[%s273 + $0x8] sm:$0xf]
      %v362 = vld [vmem:[%s273 + $0xc] sm:$0xf]
      %v363 = vld [vmem:[%s285] sm:$0xf]
      %v364 = vld [vmem:[%s285 + $0x4] sm:$0xf]
      %v369 = vunpack.c.l.b16 %v359
      %v370 = vunpack.c.l.b16 %v360
      %v371 = vunpack.c.l.b16 %v361
      %v372 = vunpack.c.l.b16 %v362
      %v373 = vpack.c.b16 %v370, %v369
      %v374 = vpack.c.b16 %v372, %v371
      %v377 = vunpack.c.l.b16 %v363
      %v378 = vunpack.c.l.b16 %v364
      %v379 = vpack.c.b16 %v378, %v377
      %vm380 = vcmask 64512
      %v382 = vsel %vm380, %v373, 0
      %v385 = vsel %vm380, %v374, 0
      %v388 = vsel %vm380, %v379, 0
      %390 = vmatprep.subr.bf16.mxu0 0
      %391 = vmatpush1.bf16.xpose.msra.mxu0 %v388
      %392 = vmatprep.subr.bf16.mxu0 0
      %393 = vmatpush1.bf16.xpose.msra.mxu0 0
      %394 = vmatprep.subr.bf16.mxu0 0
      %395 = vmatpush1.bf16.xpose.msra.mxu0 0
      %396 = vmatprep.subr.bf16.mxu0 0
      %397 = vmatpush1.bf16.xpose.msra.mxu0 0
      %398 = vmatprep.subr.bf16.mxu0 0
      %399 = vmatpush1.bf16.xpose.msra.mxu0 0
      %400 = vmatprep.subr.bf16.mxu0 0
      %401 = vmatpush1.bf16.xpose.msra.mxu0 0
      %402 = vmatprep.subr.bf16.mxu0 0
      %403 = vmatpush1.bf16.xpose.msra.mxu0 0
      %404 = vmatprep.subr.bf16.mxu0 0
      %405 = vmatpush1.bf16.xpose.msra.mxu0 0
      %406 = vmatprep.subr.bf16.mxu0 0
      %407 = vmatpush1.bf16.xpose.msra.mxu0 0
      %408 = vmatprep.subr.bf16.mxu0 0
      %409 = vmatpush1.bf16.xpose.msra.mxu0 0
      %410 = vmatprep.subr.bf16.mxu0 0
      %411 = vmatpush1.bf16.xpose.msra.mxu0 0
      %412 = vmatprep.subr.bf16.mxu0 0
      %413 = vmatpush1.bf16.xpose.msra.mxu0 0
      %414 = vmatprep.subr.bf16.mxu0 0
      %415 = vmatpush1.bf16.xpose.msra.mxu0 0
      %416 = vmatprep.subr.bf16.mxu0 0
      %417 = vmatpush1.bf16.xpose.msra.mxu0 0
      %418 = vmatprep.subr.bf16.mxu0 0
      %419 = vmatpush1.bf16.xpose.msra.mxu0 0
      %420 = vmatprep.subr.bf16.mxu0 0
      %421 = vmatpush1.bf16.xpose.msra.mxu0 0
      %422 = vmatprep.mubr.bf16.mxu0 0
      %423 = vmatmul.mubr.bf16.gmra.mrb[0].mxu0 %v382
      %v424 = vpop.f32.mrb[0].mxu0
      %v425 = vadd.f32 0.0, %v424
      %v426 = vpop.f32.mrb[0].mxu0
      %v427 = vpop.f32.mrb[0].mxu0
      %v428 = vadd.f32 0.0, %v427
      %v429 = vpop.f32.mrb[0].mxu0
      %430 = vmatprep.mubr.bf16.mxu0 0
      %431 = vmatmul.mubr.bf16.gmra.mrb[0].mxu0 %v385
      %v432 = vpop.f32.mrb[0].mxu0
      %v433 = vadd.f32 0.0, %v432
      %v434 = vpop.f32.mrb[0].mxu0
      %v435 = vpop.f32.mrb[0].mxu0
      %v436 = vadd.f32 0.0, %v435
      %v437 = vpop.f32.mrb[0].mxu0
      %438 = vdwg.mxu0
      %v439 = vsel %vm357, %v425, -1e+30
      %v440 = vsel %vm358, %v428, -1e+30
      %v441 = vsel %vm357, %v433, -1e+30
      %v442 = vsel %vm358, %v436, -1e+30
      %v443 = vld [vmem:[#allocation2] sm:$0xff]
      %v444 = vld [vmem:[#allocation2 + $0x8] sm:$0xff]
      %v445 = vld [vmem:[#allocation2 + $0x10] sm:$0xff]
      %v446 = vld [vmem:[#allocation2 + $0x18] sm:$0xff]
      %vm447 = vcmask 130048
      %v448 = vsel %vm447, %v439, -inf
      %449 = vmax.xlane.f32.xlu0 %v448
      %v450 = vpop.xlane.xlu0 %449
      %v451 = vsel %vm447, %v440, -inf
      %452 = vmax.xlane.f32.xlu0 %v451
      %v453 = vpop.xlane.xlu0 %452
      %v454 = vsel %vm447, %v441, -inf
      %455 = vmax.xlane.f32.xlu0 %v454
      %v456 = vpop.xlane.xlu0 %455
      %v457 = vsel %vm447, %v442, -inf
      %458 = vmax.xlane.f32.xlu0 %v457
      %v459 = vpop.xlane.xlu0 %458
      %v460 = vmax.f32 %v443, %v450
      %v461 = vmax.f32 %v444, %v453
      %v462 = vmax.f32 %v445, %v456
      %v463 = vmax.f32 %v446, %v459
      %v464 = vsub.f32 %v443, %v460
      %v465 = vsub.f32 %v444, %v461
      %v466 = vsub.f32 %v445, %v462
      %v467 = vsub.f32 %v446, %v463
      %v468 = vmul.f32 %v464, 1.442695
      %v469 = vpow.pop %v468
      %v470 = vmul.f32 %v465, 1.442695
      %v471 = vpow.pop %v470
      %v472 = vmul.f32 %v466, 1.442695
      %v473 = vpow.pop %v472
      %v474 = vmul.f32 %v467, 1.442695
      %v475 = vpow.pop %v474
      %477 = vset.pattern.permute.xlu0 0
      %478 = vperm.xlu0 %477, %v460
      %v479 = vpop.permute.xlu0 %478
      %482 = vset.pattern.permute.xlu0 0
      %483 = vperm.xlu0 %482, %v461
      %v484 = vpop.permute.xlu0 %483
      %487 = vset.pattern.permute.xlu0 0
      %488 = vperm.xlu0 %487, %v462
      %v489 = vpop.permute.xlu0 %488
      %492 = vset.pattern.permute.xlu0 0
      %493 = vperm.xlu0 %492, %v463
      %v494 = vpop.permute.xlu0 %493
      %v496 = vsub.f32 %v439, %v479
      %v497 = vsub.f32 %v440, %v484
      %v498 = vsub.f32 %v441, %v489
      %v499 = vsub.f32 %v442, %v494
      %v500 = vmul.f32 %v496, 1.442695
      %v501 = vpow.pop %v500
      %v502 = vmul.f32 %v497, 1.442695
      %v503 = vpow.pop %v502
      %v504 = vmul.f32 %v498, 1.442695
      %v505 = vpow.pop %v504
      %v506 = vmul.f32 %v499, 1.442695
      %v507 = vpow.pop %v506
      %v508 = vld [vmem:[#allocation3] sm:$0xff]
      %v509 = vld [vmem:[#allocation3 + $0x8] sm:$0xff]
      %v510 = vld [vmem:[#allocation3 + $0x10] sm:$0xff]
      %v511 = vld [vmem:[#allocation3 + $0x18] sm:$0xff]
      %v512 = vmul.f32 %v469, %v508
      %v513 = vmul.f32 %v471, %v509
      %v514 = vmul.f32 %v473, %v510
      %v515 = vmul.f32 %v475, %v511
      %v516 = vsel %vm447, %v501, 0.0
      %517 = vadd.xlane.f32.xlu0 %v516
      %v518 = vpop.xlane.xlu0 %517
      %v519 = vsel %vm447, %v503, 0.0
      %520 = vadd.xlane.f32.xlu0 %v519
      %v521 = vpop.xlane.xlu0 %520
      %v522 = vsel %vm447, %v505, 0.0
      %523 = vadd.xlane.f32.xlu0 %v522
      %v524 = vpop.xlane.xlu0 %523
      %v525 = vsel %vm447, %v507, 0.0
      %526 = vadd.xlane.f32.xlu0 %v525
      %v527 = vpop.xlane.xlu0 %526
      %v528 = vadd.f32 %v512, %v518
      %v529 = vadd.f32 %v513, %v521
      %v530 = vadd.f32 %v514, %v524
      %v531 = vadd.f32 %v515, %v527
      %vm532 = vcmask 7168
      %533 = vst.msk [vmem:[#allocation3] sm:$0xff] %vm532, %v528
      %534 = vst.msk [vmem:[#allocation3 + $0x8] sm:$0xff] %vm532, %v529
      %535 = vst.msk [vmem:[#allocation3 + $0x10] sm:$0xff] %vm532, %v530
      %536 = vst.msk [vmem:[#allocation3 + $0x18] sm:$0xff] %vm532, %v531
      %v537 = vld [vmem:[#allocation4] sm:$0xff]
      %v538 = vld [vmem:[#allocation4 + $0x8] sm:$0xff]
      %v539 = vld [vmem:[#allocation4 + $0x10] sm:$0xff]
      %v540 = vld [vmem:[#allocation4 + $0x18] sm:$0xff]
      %542 = vset.pattern.permute.xlu0 0
      %543 = vperm.xlu0 %542, %v469
      %v544 = vpop.permute.xlu0 %543
      %547 = vset.pattern.permute.xlu0 0
      %548 = vperm.xlu0 %547, %v471
      %v549 = vpop.permute.xlu0 %548
      %552 = vset.pattern.permute.xlu0 0
      %553 = vperm.xlu0 %552, %v473
      %v554 = vpop.permute.xlu0 %553
      %557 = vset.pattern.permute.xlu0 0
      %558 = vperm.xlu0 %557, %v475
      %v559 = vpop.permute.xlu0 %558
      %v561 = vmul.f32 %v544, %v537
      %v562 = vmul.f32 %v549, %v538
      %v563 = vmul.f32 %v554, %v539
      %v564 = vmul.f32 %v559, %v540
      %v565 = vpack.c.bf16 %v503, %v501
      %v566 = vpack.c.bf16 %v507, %v505
      %v567 = vld [vmem:[%s297] sm:$0xf]
      %v568 = vld [vmem:[%s297 + $0x4] sm:$0xf]
      %v571 = vunpack.c.l.b16 %v567
      %v572 = vunpack.c.l.b16 %v568
      %v573 = vpack.c.b16 %v572, %v571
      %v576 = vsel %vm447, %v565, 0
      %v579 = vsel %vm447, %v566, 0
      %581 = vmatprep.subr.bf16.mxu0 0
      %582 = vmatpush1.bf16.msra.mxu0 %v573
      %583 = vmatprep.subr.bf16.mxu0 0
      %584 = vmatpush1.bf16.msra.mxu0 0
      %585 = vmatprep.subr.bf16.mxu0 0
      %586 = vmatpush1.bf16.msra.mxu0 0
      %587 = vmatprep.subr.bf16.mxu0 0
      %588 = vmatpush1.bf16.msra.mxu0 0
      %589 = vmatprep.subr.bf16.mxu0 0
      %590 = vmatpush1.bf16.msra.mxu0 0
      %591 = vmatprep.subr.bf16.mxu0 0
      %592 = vmatpush1.bf16.msra.mxu0 0
      %593 = vmatprep.subr.bf16.mxu0 0
      %594 = vmatpush1.bf16.msra.mxu0 0
      %595 = vmatprep.subr.bf16.mxu0 0
      %596 = vmatpush1.bf16.msra.mxu0 0
      %597 = vmatprep.subr.bf16.mxu0 0
      %598 = vmatpush1.bf16.msra.mxu0 0
      %599 = vmatprep.subr.bf16.mxu0 0
      %600 = vmatpush1.bf16.msra.mxu0 0
      %601 = vmatprep.subr.bf16.mxu0 0
      %602 = vmatpush1.bf16.msra.mxu0 0
      %603 = vmatprep.subr.bf16.mxu0 0
      %604 = vmatpush1.bf16.msra.mxu0 0
      %605 = vmatprep.subr.bf16.mxu0 0
      %606 = vmatpush1.bf16.msra.mxu0 0
      %607 = vmatprep.subr.bf16.mxu0 0
      %608 = vmatpush1.bf16.msra.mxu0 0
      %609 = vmatprep.subr.bf16.mxu0 0
      %610 = vmatpush1.bf16.msra.mxu0 0
      %611 = vmatprep.subr.bf16.mxu0 0
      %612 = vmatpush1.bf16.msra.mxu0 0
      %613 = vmatprep.mubr.bf16.mxu0 0
      %614 = vmatmul.mubr.bf16.gmra.mrb[0].mxu0 %v576
      %v615 = vpop.f32.mrb[0].mxu0
      %v616 = vadd.f32 0.0, %v615
      %v617 = vpop.f32.mrb[0].mxu0
      %v618 = vpop.f32.mrb[0].mxu0
      %v619 = vadd.f32 0.0, %v618
      %v620 = vpop.f32.mrb[0].mxu0
      %621 = vmatprep.mubr.bf16.mxu0 0
      %622 = vmatmul.mubr.bf16.gmra.mrb[0].mxu0 %v579
      %v623 = vpop.f32.mrb[0].mxu0
      %v624 = vadd.f32 0.0, %v623
      %v625 = vpop.f32.mrb[0].mxu0
      %v626 = vpop.f32.mrb[0].mxu0
      %v627 = vadd.f32 0.0, %v626
      %v628 = vpop.f32.mrb[0].mxu0
      %629 = vdwg.mxu0
      %v630 = vadd.f32 %v561, %v616
      %v631 = vadd.f32 %v562, %v619
      %v632 = vadd.f32 %v563, %v624
      %v633 = vadd.f32 %v564, %v627
      %634 = vst.msk [vmem:[#allocation4] sm:$0xff] %vm380, %v630
      %635 = vst.msk [vmem:[#allocation4 + $0x8] sm:$0xff] %vm380, %v631
      %636 = vst.msk [vmem:[#allocation4 + $0x10] sm:$0xff] %vm380, %v632
      %637 = vst.msk [vmem:[#allocation4 + $0x18] sm:$0xff] %vm380, %v633
      %638 = vst.msk [vmem:[#allocation2] sm:$0xff] %vm532, %v460
      %639 = vst.msk [vmem:[#allocation2 + $0x8] sm:$0xff] %vm532, %v461
      %640 = vst.msk [vmem:[#allocation2 + $0x10] sm:$0xff] %vm532, %v462
      %641 = vst.msk [vmem:[#allocation2 + $0x18] sm:$0xff] %vm532, %v463
      %s642 = scalar_lea.vmem %s273, 16
      %v643 = vld [vmem:[%s642] sm:$0xf]
      %v644 = vld [vmem:[%s642 + $0x4] sm:$0xf]
      %v645 = vld [vmem:[%s642 + $0x8] sm:$0xf]
      %v646 = vld [vmem:[%s642 + $0xc] sm:$0xf]
      %s647 = scalar_lea.vmem %s285, 8
      %v648 = vld [vmem:[%s647] sm:$0xf]
      %v649 = vld [vmem:[%s647 + $0x4] sm:$0xf]
      %v654 = vunpack.c.l.b16 %v643
      %v655 = vunpack.c.l.b16 %v644
      %v656 = vunpack.c.l.b16 %v645
      %v657 = vunpack.c.l.b16 %v646
      %v658 = vpack.c.b16 %v655, %v654
      %v659 = vpack.c.b16 %v657, %v656
      %v662 = vunpack.c.l.b16 %v648
      %v663 = vunpack.c.l.b16 %v649
      %v664 = vpack.c.b16 %v663, %v662
      %v666 = vsel %vm380, %v658, 0
      %v669 = vsel %vm380, %v659, 0
      %v672 = vsel %vm380, %v664, 0
      %674 = vmatprep.subr.bf16.mxu0 0
      %675 = vmatpush1.bf16.xpose.msra.mxu0 %v672
      %676 = vmatprep.subr.bf16.mxu0 0
      %677 = vmatpush1.bf16.xpose.msra.mxu0 0
      %678 = vmatprep.subr.bf16.mxu0 0
      %679 = vmatpush1.bf16.xpose.msra.mxu0 0
      %680 = vmatprep.subr.bf16.mxu0 0
      %681 = vmatpush1.bf16.xpose.msra.mxu0 0
      %682 = vmatprep.subr.bf16.mxu0 0
      %683 = vmatpush1.bf16.xpose.msra.mxu0 0
      %684 = vmatprep.subr.bf16.mxu0 0
      %685 = vmatpush1.bf16.xpose.msra.mxu0 0
      %686 = vmatprep.subr.bf16.mxu0 0
      %687 = vmatpush1.bf16.xpose.msra.mxu0 0
      %688 = vmatprep.subr.bf16.mxu0 0
      %689 = vmatpush1.bf16.xpose.msra.mxu0 0
      %690 = vmatprep.subr.bf16.mxu0 0
      %691 = vmatpush1.bf16.xpose.msra.mxu0 0
      %692 = vmatprep.subr.bf16.mxu0 0
      %693 = vmatpush1.bf16.xpose.msra.mxu0 0
      %694 = vmatprep.subr.bf16.mxu0 0
      %695 = vmatpush1.bf16.xpose.msra.mxu0 0
      %696 = vmatprep.subr.bf16.mxu0 0
      %697 = vmatpush1.bf16.xpose.msra.mxu0 0
      %698 = vmatprep.subr.bf16.mxu0 0
      %699 = vmatpush1.bf16.xpose.msra.mxu0 0
      %700 = vmatprep.subr.bf16.mxu0 0
      %701 = vmatpush1.bf16.xpose.msra.mxu0 0
      %702 = vmatprep.subr.bf16.mxu0 0
      %703 = vmatpush1.bf16.xpose.msra.mxu0 0
      %704 = vmatprep.subr.bf16.mxu0 0
      %705 = vmatpush1.bf16.xpose.msra.mxu0 0
      %706 = vmatprep.mubr.bf16.mxu0 0
      %707 = vmatmul.mubr.bf16.gmra.mrb[0].mxu0 %v666
      %v708 = vpop.f32.mrb[0].mxu0
      %v709 = vadd.f32 0.0, %v708
      %v710 = vpop.f32.mrb[0].mxu0
      %v711 = vpop.f32.mrb[0].mxu0
      %v712 = vadd.f32 0.0, %v711
      %v713 = vpop.f32.mrb[0].mxu0
      %714 = vmatprep.mubr.bf16.mxu0 0
      %715 = vmatmul.mubr.bf16.gmra.mrb[0].mxu0 %v669
      %v716 = vpop.f32.mrb[0].mxu0
      %v717 = vadd.f32 0.0, %v716
      %v718 = vpop.f32.mrb[0].mxu0
      %v719 = vpop.f32.mrb[0].mxu0
      %v720 = vadd.f32 0.0, %v719
      %v721 = vpop.f32.mrb[0].mxu0
      %722 = vdwg.mxu0
      %v723 = vsel %vm357, %v709, -1e+30
      %v724 = vsel %vm358, %v712, -1e+30
      %v725 = vsel %vm357, %v717, -1e+30
      %v726 = vsel %vm358, %v720, -1e+30
      %v727 = vld [vmem:[#allocation2 + $0x20] sm:$0xff]
      %v728 = vld [vmem:[#allocation2 + $0x28] sm:$0xff]
      %v729 = vld [vmem:[#allocation2 + $0x30] sm:$0xff]
      %v730 = vld [vmem:[#allocation2 + $0x38] sm:$0xff]
      %v731 = vsel %vm447, %v723, -inf
      %732 = vmax.xlane.f32.xlu0 %v731
      %v733 = vpop.xlane.xlu0 %732
      %v734 = vsel %vm447, %v724, -inf
      %735 = vmax.xlane.f32.xlu0 %v734
      %v736 = vpop.xlane.xlu0 %735
      %v737 = vsel %vm447, %v725, -inf
      %738 = vmax.xlane.f32.xlu0 %v737
      %v739 = vpop.xlane.xlu0 %738
      %v740 = vsel %vm447, %v726, -inf
      %741 = vmax.xlane.f32.xlu0 %v740
      %v742 = vpop.xlane.xlu0 %741
      %v743 = vmax.f32 %v727, %v733
      %v744 = vmax.f32 %v728, %v736
      %v745 = vmax.f32 %v729, %v739
      %v746 = vmax.f32 %v730, %v742
      %v747 = vsub.f32 %v727, %v743
      %v748 = vsub.f32 %v728, %v744
      %v749 = vsub.f32 %v729, %v745
      %v750 = vsub.f32 %v730, %v746
      %v751 = vmul.f32 %v747, 1.442695
      %v752 = vpow.pop %v751
      %v753 = vmul.f32 %v748, 1.442695
      %v754 = vpow.pop %v753
      %v755 = vmul.f32 %v749, 1.442695
      %v756 = vpow.pop %v755
      %v757 = vmul.f32 %v750, 1.442695
      %v758 = vpow.pop %v757
      %760 = vset.pattern.permute.xlu0 0
      %761 = vperm.xlu0 %760, %v743
      %v762 = vpop.permute.xlu0 %761
      %765 = vset.pattern.permute.xlu0 0
      %766 = vperm.xlu0 %765, %v744
      %v767 = vpop.permute.xlu0 %766
      %770 = vset.pattern.permute.xlu0 0
      %771 = vperm.xlu0 %770, %v745
      %v772 = vpop.permute.xlu0 %771
      %775 = vset.pattern.permute.xlu0 0
      %776 = vperm.xlu0 %775, %v746
      %v777 = vpop.permute.xlu0 %776
      %v779 = vsub.f32 %v723, %v762
      %v780 = vsub.f32 %v724, %v767
      %v781 = vsub.f32 %v725, %v772
      %v782 = vsub.f32 %v726, %v777
      %v783 = vmul.f32 %v779, 1.442695
      %v784 = vpow.pop %v783
      %v785 = vmul.f32 %v780, 1.442695
      %v786 = vpow.pop %v785
      %v787 = vmul.f32 %v781, 1.442695
      %v788 = vpow.pop %v787
      %v789 = vmul.f32 %v782, 1.442695
      %v790 = vpow.pop %v789
      %v791 = vld [vmem:[#allocation3 + $0x20] sm:$0xff]
      %v792 = vld [vmem:[#allocation3 + $0x28] sm:$0xff]
      %v793 = vld [vmem:[#allocation3 + $0x30] sm:$0xff]
      %v794 = vld [vmem:[#allocation3 + $0x38] sm:$0xff]
      %v795 = vmul.f32 %v752, %v791
      %v796 = vmul.f32 %v754, %v792
      %v797 = vmul.f32 %v756, %v793
      %v798 = vmul.f32 %v758, %v794
      %v799 = vsel %vm447, %v784, 0.0
      %800 = vadd.xlane.f32.xlu0 %v799
      %v801 = vpop.xlane.xlu0 %800
      %v802 = vsel %vm447, %v786, 0.0
      %803 = vadd.xlane.f32.xlu0 %v802
      %v804 = vpop.xlane.xlu0 %803
      %v805 = vsel %vm447, %v788, 0.0
      %806 = vadd.xlane.f32.xlu0 %v805
      %v807 = vpop.xlane.xlu0 %806
      %v808 = vsel %vm447, %v790, 0.0
      %809 = vadd.xlane.f32.xlu0 %v808
      %v810 = vpop.xlane.xlu0 %809
      %v811 = vadd.f32 %v795, %v801
      %v812 = vadd.f32 %v796, %v804
      %v813 = vadd.f32 %v797, %v807
      %v814 = vadd.f32 %v798, %v810
      %815 = vst.msk [vmem:[#allocation3 + $0x20] sm:$0xff] %vm532, %v811
      %816 = vst.msk [vmem:[#allocation3 + $0x28] sm:$0xff] %vm532, %v812
      %817 = vst.msk [vmem:[#allocation3 + $0x30] sm:$0xff] %vm532, %v813
      %818 = vst.msk [vmem:[#allocation3 + $0x38] sm:$0xff] %vm532, %v814
      %v819 = vld [vmem:[#allocation4 + $0x20] sm:$0xff]
      %v820 = vld [vmem:[#allocation4 + $0x28] sm:$0xff]
      %v821 = vld [vmem:[#allocation4 + $0x30] sm:$0xff]
      %v822 = vld [vmem:[#allocation4 + $0x38] sm:$0xff]
      %824 = vset.pattern.permute.xlu0 0
      %825 = vperm.xlu0 %824, %v752
      %v826 = vpop.permute.xlu0 %825
      %829 = vset.pattern.permute.xlu0 0
      %830 = vperm.xlu0 %829, %v754
      %v831 = vpop.permute.xlu0 %830
      %834 = vset.pattern.permute.xlu0 0
      %835 = vperm.xlu0 %834, %v756
      %v836 = vpop.permute.xlu0 %835
      %839 = vset.pattern.permute.xlu0 0
      %840 = vperm.xlu0 %839, %v758
      %v841 = vpop.permute.xlu0 %840
      %v843 = vmul.f32 %v826, %v819
      %v844 = vmul.f32 %v831, %v820
      %v845 = vmul.f32 %v836, %v821
      %v846 = vmul.f32 %v841, %v822
      %v847 = vpack.c.bf16 %v786, %v784
      %v848 = vpack.c.bf16 %v790, %v788
      %s849 = scalar_lea.vmem %s297, 8
      %v850 = vld [vmem:[%s849] sm:$0xf]
      %v851 = vld [vmem:[%s849 + $0x4] sm:$0xf]
      %v854 = vunpack.c.l.b16 %v850
      %v855 = vunpack.c.l.b16 %v851
      %v856 = vpack.c.b16 %v855, %v854
      %v859 = vsel %vm447, %v847, 0
      %v862 = vsel %vm447, %v848, 0
      %864 = vmatprep.subr.bf16.mxu0 0
      %865 = vmatpush1.bf16.msra.mxu0 %v856
      %866 = vmatprep.subr.bf16.mxu0 0
      %867 = vmatpush1.bf16.msra.mxu0 0
      %868 = vmatprep.subr.bf16.mxu0 0
      %869 = vmatpush1.bf16.msra.mxu0 0
      %870 = vmatprep.subr.bf16.mxu0 0
      %871 = vmatpush1.bf16.msra.mxu0 0
      %872 = vmatprep.subr.bf16.mxu0 0
      %873 = vmatpush1.bf16.msra.mxu0 0
      %874 = vmatprep.subr.bf16.mxu0 0
      %875 = vmatpush1.bf16.msra.mxu0 0
      %876 = vmatprep.subr.bf16.mxu0 0
      %877 = vmatpush1.bf16.msra.mxu0 0
      %878 = vmatprep.subr.bf16.mxu0 0
      %879 = vmatpush1.bf16.msra.mxu0 0
      %880 = vmatprep.subr.bf16.mxu0 0
      %881 = vmatpush1.bf16.msra.mxu0 0
      %882 = vmatprep.subr.bf16.mxu0 0
      %883 = vmatpush1.bf16.msra.mxu0 0
      %884 = vmatprep.subr.bf16.mxu0 0
      %885 = vmatpush1.bf16.msra.mxu0 0
      %886 = vmatprep.subr.bf16.mxu0 0
      %887 = vmatpush1.bf16.msra.mxu0 0
      %888 = vmatprep.subr.bf16.mxu0 0
      %889 = vmatpush1.bf16.msra.mxu0 0
      %890 = vmatprep.subr.bf16.mxu0 0
      %891 = vmatpush1.bf16.msra.mxu0 0
      %892 = vmatprep.subr.bf16.mxu0 0
      %893 = vmatpush1.bf16.msra.mxu0 0
      %894 = vmatprep.subr.bf16.mxu0 0
      %895 = vmatpush1.bf16.msra.mxu0 0
      %896 = vmatprep.mubr.bf16.mxu0 0
      %897 = vmatmul.mubr.bf16.gmra.mrb[0].mxu0 %v859
      %v898 = vpop.f32.mrb[0].mxu0
      %v899 = vadd.f32 0.0, %v898
      %v900 = vpop.f32.mrb[0].mxu0
      %v901 = vpop.f32.mrb[0].mxu0
      %v902 = vadd.f32 0.0, %v901
      %v903 = vpop.f32.mrb[0].mxu0
      %904 = vmatprep.mubr.bf16.mxu0 0
      %905 = vmatmul.mubr.bf16.gmra.mrb[0].mxu0 %v862
      %v906 = vpop.f32.mrb[0].mxu0
      %v907 = vadd.f32 0.0, %v906
      %v908 = vpop.f32.mrb[0].mxu0
      %v909 = vpop.f32.mrb[0].mxu0
      %v910 = vadd.f32 0.0, %v909
      %v911 = vpop.f32.mrb[0].mxu0
      %912 = vdwg.mxu0
      %v913 = vadd.f32 %v843, %v899
      %v914 = vadd.f32 %v844, %v902
      %v915 = vadd.f32 %v845, %v907
      %v916 = vadd.f32 %v846, %v910
      %917 = vst.msk [vmem:[#allocation4 + $0x20] sm:$0xff] %vm380, %v913
      %918 = vst.msk [vmem:[#allocation4 + $0x28] sm:$0xff] %vm380, %v914
      %919 = vst.msk [vmem:[#allocation4 + $0x30] sm:$0xff] %vm380, %v915
      %920 = vst.msk [vmem:[#allocation4 + $0x38] sm:$0xff] %vm380, %v916
      %921 = vst.msk [vmem:[#allocation2 + $0x20] sm:$0xff] %vm532, %v743
      %922 = vst.msk [vmem:[#allocation2 + $0x28] sm:$0xff] %vm532, %v744
      %923 = vst.msk [vmem:[#allocation2 + $0x30] sm:$0xff] %vm532, %v745
      %924 = vst.msk [vmem:[#allocation2 + $0x38] sm:$0xff] %vm532, %v746
      %p925 = scmp.eq.s32.totalorder %s314, %s313
      // Predicated region
      $region37: #{gqa_forward.4} parent=31 // pred_check
        %p926 = pneg %p925
      $region38: #{gqa_forward.4} parent=31 // pred_check_branch
        %928 = sbr.rel (%p926) target = $region40
      $region39: #{gqa_forward.4} parent=31 // pred_region
        %v929 = vld [vmem:[#allocation4] sm:$0xff]
        %v930 = vld [vmem:[#allocation4 + $0x8] sm:$0xff]
        %v931 = vld [vmem:[#allocation4 + $0x10] sm:$0xff]
        %v932 = vld [vmem:[#allocation4 + $0x18] sm:$0xff]
        %v933 = vld [vmem:[#allocation4 + $0x20] sm:$0xff]
        %v934 = vld [vmem:[#allocation4 + $0x28] sm:$0xff]
        %v935 = vld [vmem:[#allocation4 + $0x30] sm:$0xff]
        %v936 = vld [vmem:[#allocation4 + $0x38] sm:$0xff]
        %v937 = vld [vmem:[#allocation3] sm:$0xff]
        %v938 = vld [vmem:[#allocation3 + $0x8] sm:$0xff]
        %v939 = vld [vmem:[#allocation3 + $0x10] sm:$0xff]
        %v940 = vld [vmem:[#allocation3 + $0x18] sm:$0xff]
        %v941 = vld [vmem:[#allocation3 + $0x20] sm:$0xff]
        %v942 = vld [vmem:[#allocation3 + $0x28] sm:$0xff]
        %v943 = vld [vmem:[#allocation3 + $0x30] sm:$0xff]
        %v944 = vld [vmem:[#allocation3 + $0x38] sm:$0xff]
        %v945 = vrcp.pop %v937
        %v946 = vrcp.pop %v938
        %v947 = vrcp.pop %v939
        %v948 = vrcp.pop %v940
        %v949 = vrcp.pop %v941
        %v950 = vrcp.pop %v942
        %v951 = vrcp.pop %v943
        %v952 = vrcp.pop %v944
        %954 = vset.pattern.permute.xlu0 0
        %955 = vperm.xlu0 %954, %v945
        %v956 = vpop.permute.xlu0 %955
        %959 = vset.pattern.permute.xlu0 0
        %960 = vperm.xlu0 %959, %v946
        %v961 = vpop.permute.xlu0 %960
        %964 = vset.pattern.permute.xlu0 0
        %965 = vperm.xlu0 %964, %v947
        %v966 = vpop.permute.xlu0 %965
        %969 = vset.pattern.permute.xlu0 0
        %970 = vperm.xlu0 %969, %v948
        %v971 = vpop.permute.xlu0 %970
        %974 = vset.pattern.permute.xlu0 0
        %975 = vperm.xlu0 %974, %v949
        %v976 = vpop.permute.xlu0 %975
        %979 = vset.pattern.permute.xlu0 0
        %980 = vperm.xlu0 %979, %v950
        %v981 = vpop.permute.xlu0 %980
        %984 = vset.pattern.permute.xlu0 0
        %985 = vperm.xlu0 %984, %v951
        %v986 = vpop.permute.xlu0 %985
        %989 = vset.pattern.permute.xlu0 0
        %990 = vperm.xlu0 %989, %v952
        %v991 = vpop.permute.xlu0 %990
        %v993 = vmul.f32 %v929, %v956
        %v994 = vmul.f32 %v930, %v961
        %v995 = vmul.f32 %v931, %v966
        %v996 = vmul.f32 %v932, %v971
        %v997 = vmul.f32 %v933, %v976
        %v998 = vmul.f32 %v934, %v981
        %v999 = vmul.f32 %v935, %v986
        %v1000 = vmul.f32 %v936, %v991
        %v1001 = vpack.c.bf16 %v994, %v993
        %v1003 = vunpack.c.l.b16 %v1001
        %v1004 = vunpack.c.h.b16 %v1001
        %v1005 = vpack.c.b16 %v1003, %v1003
        %v1006 = vpack.c.b16 %v1004, %v1004
        %vm1009 = vcmask 60416
        %1010 = vst.msk [vmem:[%s309] sm:$0xf] %vm1009, %v1005
        %1011 = vst.msk [vmem:[%s309 + $0x4] sm:$0xf] %vm1009, %v1006
        %v1012 = vpack.c.bf16 %v996, %v995
        %v1014 = vunpack.c.l.b16 %v1012
        %v1015 = vunpack.c.h.b16 %v1012
        %v1016 = vpack.c.b16 %v1014, %v1014
        %v1017 = vpack.c.b16 %v1015, %v1015
        %1018 = vrot.lane.b32.xlu0 %v1016, 8
        %v1019 = vpop.permute.xlu0 %1018
        %1020 = vrot.lane.b32.xlu0 %v1017, 8
        %v1021 = vpop.permute.xlu0 %1020
        %vm1024 = vcmask 126016
        %1025 = vst.msk [vmem:[%s309] sm:$0xf] %vm1024, %v1019
        %1026 = vst.msk [vmem:[%s309 + $0x4] sm:$0xf] %vm1024, %v1021
        %v1027 = vpack.c.bf16 %v998, %v997
        %v1029 = vunpack.c.l.b16 %v1027
        %v1030 = vunpack.c.h.b16 %v1027
        %v1031 = vpack.c.b16 %v1029, %v1029
        %v1032 = vpack.c.b16 %v1030, %v1030
        %1033 = vrot.lane.b32.xlu0 %v1031, 16
        %v1034 = vpop.permute.xlu0 %1033
        %1035 = vrot.lane.b32.xlu0 %v1032, 16
        %v1036 = vpop.permute.xlu0 %1035
        %vm1039 = vcmask 191616
        %1040 = vst.msk [vmem:[%s309] sm:$0xf] %vm1039, %v1034
        %1041 = vst.msk [vmem:[%s309 + $0x4] sm:$0xf] %vm1039, %v1036
        %v1042 = vpack.c.bf16 %v1000, %v999
        %v1044 = vunpack.c.l.b16 %v1042
        %v1045 = vunpack.c.h.b16 %v1042
        %v1046 = vpack.c.b16 %v1044, %v1044
        %v1047 = vpack.c.b16 %v1045, %v1045
        %1048 = vrot.lane.b32.xlu0 %v1046, 24
        %v1049 = vpop.permute.xlu0 %1048
        %1050 = vrot.lane.b32.xlu0 %v1047, 24
        %v1051 = vpop.permute.xlu0 %1050
        %vm1054 = vcmask 257216
        %1055 = vst.msk [vmem:[%s309] sm:$0xf] %vm1054, %v1049
        %1056 = vst.msk [vmem:[%s309 + $0x4] sm:$0xf] %vm1054, %v1051
      $region40: #{gqa_forward.4} parent=31 // pred_fallthru
        _
      %s1057 = sld [smem:[#allocation6 + %s23]]
      %s1058 = smul.u32 2, %s1057
      %p1059 = scmp.lt.s32.totalorder %s22, 1
      %s1060 = scalar_select %p1059, %s22, 1
      %p1061 = scmp.lt.s32.totalorder %s1058, 1
      %s1062 = scalar_select %p1061, %s1058, 1
      %s1063 = smul.addr %s1060, 2
      %s1064 = sadd.s32 %s1062, %s1063
      %s1065 = smul.addr %s1064, 4
      %s1066 = scalar_lea.vmem %s5, %s1065
      // Predicated region
      $region41: #{gqa_forward.4} parent=31 // pred_check
        %p1067 = pneg %p142
      $region42: #{gqa_forward.4} parent=31 // pred_check_branch
        %1069 = sbr.rel (%p1067) target = $region44
      $region43: #{gqa_forward.4} parent=31 // pred_region
        %s1070 = sld [smem:[#allocation6 + %s23]]
        %s1071 = smul.u32 2, %s1070
      $region44: #{gqa_forward.4} parent=31 // pred_fallthru
        _
    $region32: #{gqa_forward.4} parent=5 // pred_fallthru
      _
    %p1072 = scmp.le.s32.totalorder 2, %s13
    // Predicated region
    $region45: #{gqa_forward.4} parent=5 // pred_check
      %p1073 = pneg %p1072
    $region46: #{gqa_forward.4} parent=5 // pred_check_branch
      %1075 = sbr.rel (%p1073) target = $region48
    $region47: #{gqa_forward.4} parent=5 // pred_region
      %s1076 = ssub.s32 %s13, 2
      // Predicated region
      $region49: #{gqa_forward.4} parent=47 // pred_check
        %p1077 = pneg %p148
      $region50: #{gqa_forward.4} parent=47 // pred_check_branch
        %1079 = sbr.rel (%p1077) target = $region52
      $region51: #{gqa_forward.4} parent=47 // pred_region
        %s1080 = sld [smem:[#allocation6 + %s25]]
        %s1081 = smul.u32 2, %s1080
        %p1082 = scmp.lt.s32.totalorder %s24, 1
        %s1083 = scalar_select %p1082, %s24, 1
        %p1084 = scmp.lt.s32.totalorder %s1081, 1
        %s1085 = scalar_select %p1084, %s1081, 1
        %s1086 = smul.addr %s1083, 2
        %s1087 = sadd.s32 %s1085, %s1086
        %s1088 = smul.addr %s1087, 4
        %s1089 = scalar_lea.vmem %s5, %s1088
      $region52: #{gqa_forward.4} parent=47 // pred_fallthru
        _
    $region48: #{gqa_forward.4} parent=5 // pred_fallthru
      _
  $region6: #{gqa_forward.4} parent=0 // loop_footer
    %s17 = sadd.s32 1, %s13
  $region7: #{gqa_forward.4} parent=0 // loop_footer_branch
    %12 = sbr.rel target = $region3
  $region8: #{gqa_forward.4} parent=0 // loop_exit
    _

</llo_original>
